<compile_context>
chip_gen: v7x
topology: tpu7x:2x2x1
jax: 0.10.0
libtpu: 0.0.40
codegen_flags: <defaults>
</compile_context>

<pallas_src>
from functools import partial

import jax
import jax.numpy as jnp
from jax.experimental import pallas as pl
from jax.experimental.pallas import tpu as pltpu


def _residual_quantize_kernel(x_ref, cb_ref, cbsq_half_ref,
                              q_ref, idx_ref, loss_ref, counts_ref,
                              *, n_valid, mask_needed):
    """One grid step processes a (TN, D) tile of flattened inputs.

    x_ref:         (TN, D)     f32  input tile (stage-0 residual)
    cb_ref:        (Q, C, D)   f32  all codebooks (grid-invariant)
    cbsq_half_ref: (Q, C)      f32  0.5 * ||centroid||^2 (precomputed in wrapper)
    q_ref:         (TN, D)     f32  quantized output tile
    idx_ref:       (Q, TN)     i32  nearest-centroid index per stage (lane-dense)
    loss_ref:      (1, 1, 128) f32  masked per-tile sum of squared errors (all lanes equal)
    counts_ref:    (1, Q, C)   f32  per-tile cluster-count partials
    """
    x = x_ref[...].astype(jnp.float32)                  # (TN, D)
    tn, d = x.shape
    n_q, c, _ = cb_ref.shape
    cbsq_half = cbsq_half_ref[...]                      # (Q, C)

    # Padding mask as a (1, TN) row vector; folded into the counts / loss matmuls.
    if mask_needed:
        col = jax.lax.broadcasted_iota(jnp.int32, (1, tn), 1)
        valid_row = ((pl.program_id(0) * tn + col) < n_valid).astype(jnp.float32)
    else:
        valid_row = jnp.ones((1, tn), dtype=jnp.float32)

    residual = x
    lossrow = jnp.zeros((tn, 1), dtype=jnp.float32)     # per-row sum over D and stages

    for q in range(n_q):                                # static unrolled loop over stages
        cb = cb_ref[q]                                  # (C, D)

        # argmin_c ||r - cb_c||^2 == argmin_c (0.5*||cb_c||^2 - r.cb_c)
        # (per-row ||r||^2 dropped; the 2x is folded into the precomputed half-norms).
        cross = jax.lax.dot_general(residual, cb, (((1,), (1,)), ((), ())),
                                    preferred_element_type=jnp.float32)   # (TN, C)
        dist = cbsq_half[q][None, :] - cross

        # First-occurrence argmin over the centroid (lane) axis.
        # TODO(synk): all-NaN rows fall back to index C / zero onehot (reference argmin
        # would return 0); harmless for finite inputs.
        dmin = jnp.min(dist, axis=-1, keepdims=True)
        lane = jax.lax.broadcasted_iota(jnp.int32, dist.shape, 1)
        nn = jnp.min(jnp.where(dist <= dmin, lane, c), axis=-1)           # (TN,)
        onehot = (lane == nn[:, None]).astype(jnp.float32)                # (TN, C)

        quant = jnp.dot(onehot, cb, preferred_element_type=jnp.float32)   # (TN, D)
        residual = residual - quant
        # (quant - residual_old)^2 == residual_new^2 (exact negation in fp);
        # lane-reduce each stage into a (TN,1) carry.
        lossrow = lossrow + jnp.sum(residual * residual, axis=-1, keepdims=True)

        # Per-stage stores: short live ranges, relayout hidden under next stage's MXU work.
        idx_ref[q:q + 1, :] = nn.reshape(1, tn).astype(jnp.int32)
        # Cluster counts on the MXU with the padding mask folded in: (1,TN) x (TN,C).
        counts_ref[0, q:q + 1, :] = jnp.dot(valid_row, onehot,
                                            preferred_element_type=jnp.float32)

    # Total quantized = x - final residual (no separate accumulator).
    q_ref[...] = (x - residual).astype(q_ref.dtype)

    # Masked per-tile scalar loss: (1,TN) x (TN,1); broadcast across 128 lanes so the
    # output block is lane-dense (single unmasked store per tile).
    loss_tile = jnp.dot(valid_row, lossrow, preferred_element_type=jnp.float32)  # (1, 1)
    loss_ref[...] = jnp.broadcast_to(loss_tile.reshape(1, 1, 1), loss_ref.shape)


def residual_quantize(inputs, codebooks, *, block_n=512):
    """JAX wrapper reproducing ResidualQuantizer.forward semantics (f32 path)."""
    emb_dim = inputs.shape[-1]
    flat = inputs.reshape(-1, emb_dim).astype(jnp.float32)
    n, d = flat.shape
    codebooks = codebooks.astype(jnp.float32)
    n_q, c, _ = codebooks.shape

    # block_n: 512-1024 suits v5e/v6e (128 MiB VMEM); 256-512 suits v7x (64 MiB/TC).
    # Clamp for tiny inputs so a handful of rows is not padded up to a full tile.
    if n <= block_n:
        block_n = max(8, ((n + 7) // 8) * 8)
    n_pad = ((n + block_n - 1) // block_n) * block_n
    if n_pad != n:
        flat = jnp.pad(flat, ((0, n_pad - n), (0, 0)))
    num_tiles = n_pad // block_n

    # Hoisted 0.5*||centroid||^2 (constant over the grid; the 2x is folded in here).
    cbsq_half = 0.5 * jnp.sum(codebooks * codebooks, axis=-1)   # (Q, C)

    kernel = partial(_residual_quantize_kernel, n_valid=n, mask_needed=(n_pad != n))
    out_shape = (
        jax.ShapeDtypeStruct((n_pad, d), jnp.float32),
        jax.ShapeDtypeStruct((n_q, n_pad), jnp.int32),
        jax.ShapeDtypeStruct((num_tiles, 1, 128), jnp.float32),
        jax.ShapeDtypeStruct((num_tiles, n_q, c), jnp.float32),
    )

    # Explicit VMEM budget only if the footprint exceeds the 32 MiB scoped default
    # (big codebooks / block_n on v7x's 64 MiB per-core VMEM).
    est_vmem = (4 * block_n * d * 4            # x in + q out, double-buffered
                + 2 * n_q * block_n * 4        # idx out, double-buffered
                + 2 * n_q * c * d * 4          # codebook (worst case: double-buffered)
                + 2 * n_q * c * 4              # half-norms
                + 2 * (128 + n_q * c) * 4)     # loss + counts partials
    compiler_kwargs = dict(dimension_semantics=("parallel",))
    if est_vmem > 32 * 1024 * 1024:
        compiler_kwargs["vmem_limit_bytes"] = min(int(est_vmem * 5 // 4), 64 * 1024 * 1024)

    def build(single_buffer_invariants):
        inv = {"pipeline_mode": pl.Buffered(1)} if single_buffer_invariants else {}
        return pl.pallas_call(
            kernel,
            out_shape=out_shape,
            grid_spec=pltpu.PrefetchScalarGridSpec(
                num_scalar_prefetch=0,
                grid=(num_tiles,),
                in_specs=[
                    pl.BlockSpec((block_n, d), lambda i: (i, 0)),
                    pl.BlockSpec((n_q, c, d), lambda i: (0, 0, 0), **inv),  # grid-invariant
                    pl.BlockSpec((n_q, c), lambda i: (0, 0), **inv),        # grid-invariant
                ],
                out_specs=[
                    pl.BlockSpec((block_n, d), lambda i: (i, 0)),
                    pl.BlockSpec((n_q, block_n), lambda i: (0, i)),     # lane-dense indices
                    pl.BlockSpec((1, 1, 128), lambda i: (i, 0, 0)),     # per-tile loss scalar
                    pl.BlockSpec((1, n_q, c), lambda i: (i, 0, 0)),     # per-tile counts
                ],
            ),
            compiler_params=pltpu.CompilerParams(**compiler_kwargs),
        )

    try:
        # Grid-invariant codebook / norms single-buffered: no pipelining benefit,
        # halves their resident VMEM footprint.
        q_out, idx_out, loss_tiles, counts_part = jax.block_until_ready(
            build(True)(flat, codebooks, cbsq_half))
    except Exception:
        # TODO(synk): this jax version rejects pipeline_mode=pl.Buffered(1) on the
        # top-level pallas_call; fall back to default double-buffering.
        q_out, idx_out, loss_tiles, counts_part = build(False)(flat, codebooks, cbsq_half)

    quantized = q_out[:n].reshape(inputs.shape)
    nn_idx = idx_out[:, :n].reshape((n_q,) + inputs.shape[:-1])
    # Single scalar reduce + normalization done once, outside the grid.
    loss_scalar = jnp.sum(loss_tiles[:, 0, 0]) / jnp.float32(n * d)
    # The PyTorch reference .view()s the scalar loss to inputs.shape[:-1] + (1,): broadcast.
    quantization_loss = jnp.broadcast_to(loss_scalar, inputs.shape[:-1] + (1,))
    # codebooks output = cat of per-quantizer (1, C, D) codebooks -> (Q, C, D);
    # stop_gradient_codes == detach (forward no-op).
    codebook_out = jax.lax.stop_gradient(codebooks)
    counts_total = jnp.sum(counts_part, axis=0)        # (Q, C)
    cluster_counts = [counts_total[q] for q in range(n_q)]
    return quantized, quantization_loss, nn_idx, codebook_out, cluster_counts


def _reference(inputs, codebooks):
    d = inputs.shape[-1]
    flat = inputs.reshape(-1, d).astype(jnp.float32)
    residual = flat
    quantized = jnp.zeros_like(flat)
    loss = jnp.float32(0.0)
    idxs, counts = [], []
    for q in range(codebooks.shape[0]):
        cb = codebooks[q]
        dist = jnp.sum((residual[:, None, :] - cb[None, :, :]) ** 2, axis=-1)
        nn = jnp.argmin(dist, axis=-1)
        quant = cb[nn]
        loss = loss + jnp.mean((quant - residual) ** 2)
        counts.append(jnp.sum(jax.nn.one_hot(nn, cb.shape[0]), axis=0))
        idxs.append(nn)
        quantized = quantized + quant
        residual = residual - quant
    nn_idx = jnp.stack(idxs, 0).reshape((codebooks.shape[0],) + inputs.shape[:-1])
    return quantized.reshape(inputs.shape), loss, nn_idx, counts


if __name__ == "__main__":
    key = jax.random.PRNGKey(0)
    k_in, k_cb, k_in2 = jax.random.split(key, 3)

    B, T, D = 2, 8, 32          # inputs: (batch, seq, embedding_dim)
    NQ, C = 2, 64               # 2 residual stages, 64 centroids each

    inputs = jax.random.normal(k_in, (B, T, D), dtype=jnp.float32)
    codebooks = 0.1 * jax.random.normal(k_cb, (NQ, C, D), dtype=jnp.float32)

    quantized, q_loss, nn_idx, cb_out, cluster_counts = jax.block_until_ready(
        residual_quantize(inputs, codebooks)
    )

    # Correctness check against a pure-JAX reference.
    ref_q, ref_loss, ref_idx, ref_counts = _reference(inputs, codebooks)
    assert quantized.shape == inputs.shape
    assert q_loss.shape == inputs.shape[:-1] + (1,)
    assert nn_idx.shape == (NQ,) + inputs.shape[:-1]
    assert jnp.allclose(quantized, ref_q, atol=1e-4), "quantized mismatch"
    assert jnp.allclose(q_loss[0, 0, 0], ref_loss, atol=1e-5), "loss mismatch"
    assert jnp.array_equal(nn_idx, ref_idx), "nn_idx mismatch"
    for q in range(NQ):
        assert jnp.allclose(cluster_counts[q], ref_counts[q]), "counts mismatch"

    # Second check: multi-tile grid + row padding (exercises masked counts / loss path).
    inputs2 = jax.random.normal(k_in2, (3, 70, D), dtype=jnp.float32)
    q2, l2, idx2, _, counts2 = jax.block_until_ready(
        residual_quantize(inputs2, codebooks, block_n=128)
    )
    r_q2, r_l2, r_idx2, r_counts2 = _reference(inputs2, codebooks)
    assert jnp.allclose(q2, r_q2, atol=1e-4), "quantized mismatch (padded)"
    assert jnp.allclose(l2[0, 0, 0], r_l2, atol=1e-5), "loss mismatch (padded)"
    assert jnp.array_equal(idx2, r_idx2), "nn_idx mismatch (padded)"
    for q in range(NQ):
        assert jnp.allclose(counts2[q], r_counts2[q]), "counts mismatch (padded)"

    print("KERNEL_OK")
</pallas_src>

<mosaic_0001>
module attributes {stable_mosaic.version = 11 : i64} {
  func.func @_residual_quantize_kernel(%arg0: i32, %arg1: memref<16x32xf32, #tpu.memory_space<vmem>>, %arg2: memref<2x64x32xf32, #tpu.memory_space<vmem>>, %arg3: memref<2x64xf32, #tpu.memory_space<vmem>>, %arg4: memref<16x32xf32, #tpu.memory_space<vmem>>, %arg5: memref<2x16xi32, #tpu.memory_space<vmem>>, %arg6: memref<1x1x128xf32, #tpu.memory_space<vmem>>, %arg7: memref<1x2x64xf32, #tpu.memory_space<vmem>>) attributes {dimension_semantics = [#tpu.dimension_semantics<parallel>], iteration_bounds = array<i64: 1>, scalar_prefetch = 0 : i64, scratch_operands = 0 : i64, tpu.core_type = #tpu.core_type<tc>, window_params = [{transform_indices = @transform_0, window_bounds = array<i64: 16, 32>}, {pipeline_mode = #tpu.pipeline_mode<synchronous>, transform_indices = @transform_1, window_bounds = array<i64: 2, 64, 32>}, {pipeline_mode = #tpu.pipeline_mode<synchronous>, transform_indices = @transform_2, window_bounds = array<i64: 2, 64>}, {transform_indices = @transform_3, window_bounds = array<i64: 16, 32>}, {transform_indices = @transform_4, window_bounds = array<i64: 2, 16>}, {transform_indices = @transform_5, window_bounds = array<i64: 1, 1, 128>}, {transform_indices = @transform_6, window_bounds = array<i64: 1, 2, 64>}]} {
    %c0 = arith.constant 0 : index
    %c0_0 = arith.constant 0 : index
    %0 = vector.load %arg1[%c0, %c0_0] : memref<16x32xf32, #tpu.memory_space<vmem>>, vector<16x32xf32>
    %c0_1 = arith.constant 0 : index
    %c0_2 = arith.constant 0 : index
    %1 = vector.load %arg3[%c0_1, %c0_2] : memref<2x64xf32, #tpu.memory_space<vmem>>, vector<2x64xf32>
    %cst = arith.constant 1.000000e+00 : f32
    %2 = vector.broadcast %cst : f32 to vector<1x16xf32>
    %cst_3 = arith.constant 0.000000e+00 : f32
    %3 = vector.broadcast %cst_3 : f32 to vector<16x1xf32>
    %c0_4 = arith.constant 0 : index
    %c0_5 = arith.constant 0 : index
    %c0_6 = arith.constant 0 : index
    %4 = vector.load %arg2[%c0_4, %c0_5, %c0_6] : memref<2x64x32xf32, #tpu.memory_space<vmem>>, vector<1x64x32xf32>
    %5 = vector.shape_cast %4 : vector<1x64x32xf32> to vector<64x32xf32>
    %cst_7 = arith.constant dense<0.000000e+00> : vector<16x64xf32>
    %6 = tpu.matmul %0, %5, %cst_7 {dimension_numbers = #tpu.dot_dimension_numbers<[1], [1], [0], [0], [0, 0, 1, 0], [], []>} : vector<16x32xf32>, vector<64x32xf32>, vector<16x64xf32> -> vector<16x64xf32>
    %7 = vector.extract_strided_slice %1 {offsets = [0, 0], sizes = [1, 64], strides = [1, 1]} : vector<2x64xf32> to vector<1x64xf32>
    %8 = vector.shape_cast %7 : vector<1x64xf32> to vector<64xf32>
    %9 = vector.shape_cast %8 : vector<64xf32> to vector<1x64xf32>
    %10 = vector.broadcast %9 : vector<1x64xf32> to vector<16x64xf32>
    %11 = arith.subf %10, %6 : vector<16x64xf32>
    %cst_8 = arith.constant dense<0x7F800000> : vector<16xf32>
    %12 = vector.multi_reduction <minimumf>, %11, %cst_8 [1] : vector<16x64xf32> to vector<16xf32>
    %13 = vector.shape_cast %12 : vector<16xf32> to vector<16x1xf32>
    %14 = tpu.iota {dimensions = array<i32: 1>} : vector<16x64xi32>
    %15 = vector.broadcast %13 : vector<16x1xf32> to vector<16x64xf32>
    %16 = arith.cmpf ole, %11, %15 : vector<16x64xf32>
    %c64_i32 = arith.constant 64 : i32
    %17 = vector.broadcast %c64_i32 : i32 to vector<16x64xi32>
    %18 = arith.select %16, %14, %17 : vector<16x64xi1>, vector<16x64xi32>
    %cst_9 = arith.constant dense<2147483647> : vector<16xi32>
    %19 = vector.multi_reduction <minsi>, %18, %cst_9 [1] : vector<16x64xi32> to vector<16xi32>
    %20 = vector.shape_cast %19 : vector<16xi32> to vector<16x1xi32>
    %21 = vector.broadcast %20 : vector<16x1xi32> to vector<16x64xi32>
    %22 = arith.cmpi eq, %14, %21 : vector<16x64xi32>
    %23 = arith.extui %22 : vector<16x64xi1> to vector<16x64xi32>
    %24 = arith.sitofp %23 : vector<16x64xi32> to vector<16x64xf32>
    %cst_10 = arith.constant dense<0.000000e+00> : vector<16x32xf32>
    %25 = tpu.matmul %24, %5, %cst_10 {dimension_numbers = #tpu.dot_dimension_numbers<[1], [0], [0], [1], [0, 0, 1, 1], [], []>} : vector<16x64xf32>, vector<64x32xf32>, vector<16x32xf32> -> vector<16x32xf32>
    %26 = arith.subf %0, %25 : vector<16x32xf32>
    %27 = arith.mulf %26, %26 : vector<16x32xf32>
    %cst_11 = arith.constant dense<0.000000e+00> : vector<16xf32>
    %28 = vector.multi_reduction <add>, %27, %cst_11 [1] : vector<16x32xf32> to vector<16xf32>
    %29 = vector.shape_cast %28 : vector<16xf32> to vector<16x1xf32>
    %30 = arith.addf %3, %29 : vector<16x1xf32>
    %31 = vector.shape_cast %19 : vector<16xi32> to vector<1x16xi32>
    %c0_12 = arith.constant 0 : index
    %c0_13 = arith.constant 0 : index
    %32 = vector.load %arg5[%c0_12, %c0_13] : memref<2x16xi32, #tpu.memory_space<vmem>>, vector<1x16xi32>
    tpu.vector_store %arg5[%c0_12, %c0_13], %31 {strides = array<i32>} : memref<2x16xi32, #tpu.memory_space<vmem>>, vector<1x16xi32>,
    %cst_14 = arith.constant dense<0.000000e+00> : vector<1x64xf32>
    %33 = tpu.matmul %2, %24, %cst_14 {dimension_numbers = #tpu.dot_dimension_numbers<[1], [0], [0], [1], [0, 0, 1, 1], [], []>} : vector<1x16xf32>, vector<16x64xf32>, vector<1x64xf32> -> vector<1x64xf32>
    %c0_15 = arith.constant 0 : index
    %c0_16 = arith.constant 0 : index
    %c0_17 = arith.constant 0 : index
    %34 = vector.load %arg7[%c0_15, %c0_16, %c0_17] : memref<1x2x64xf32, #tpu.memory_space<vmem>>, vector<1x1x64xf32>
    %35 = vector.shape_cast %34 : vector<1x1x64xf32> to vector<1x64xf32>
    %36 = vector.shape_cast %33 : vector<1x64xf32> to vector<1x1x64xf32>
    tpu.vector_store %arg7[%c0_15, %c0_16, %c0_17], %36 {strides = array<i32>} : memref<1x2x64xf32, #tpu.memory_space<vmem>>, vector<1x1x64xf32>,
    %c1 = arith.constant 1 : index
    %c0_18 = arith.constant 0 : index
    %c0_19 = arith.constant 0 : index
    %37 = vector.load %arg2[%c1, %c0_18, %c0_19] : memref<2x64x32xf32, #tpu.memory_space<vmem>>, vector<1x64x32xf32>
    %38 = vector.shape_cast %37 : vector<1x64x32xf32> to vector<64x32xf32>
    %cst_20 = arith.constant dense<0.000000e+00> : vector<16x64xf32>
    %39 = tpu.matmul %26, %38, %cst_20 {dimension_numbers = #tpu.dot_dimension_numbers<[1], [1], [0], [0], [0, 0, 1, 0], [], []>} : vector<16x32xf32>, vector<64x32xf32>, vector<16x64xf32> -> vector<16x64xf32>
    %40 = vector.extract_strided_slice %1 {offsets = [1, 0], sizes = [1, 64], strides = [1, 1]} : vector<2x64xf32> to vector<1x64xf32>
    %41 = vector.shape_cast %40 : vector<1x64xf32> to vector<64xf32>
    %42 = vector.shape_cast %41 : vector<64xf32> to vector<1x64xf32>
    %43 = vector.broadcast %42 : vector<1x64xf32> to vector<16x64xf32>
    %44 = arith.subf %43, %39 : vector<16x64xf32>
    %cst_21 = arith.constant dense<0x7F800000> : vector<16xf32>
    %45 = vector.multi_reduction <minimumf>, %44, %cst_21 [1] : vector<16x64xf32> to vector<16xf32>
    %46 = vector.shape_cast %45 : vector<16xf32> to vector<16x1xf32>
    %47 = tpu.iota {dimensions = array<i32: 1>} : vector<16x64xi32>
    %48 = vector.broadcast %46 : vector<16x1xf32> to vector<16x64xf32>
    %49 = arith.cmpf ole, %44, %48 : vector<16x64xf32>
    %c64_i32_22 = arith.constant 64 : i32
    %50 = vector.broadcast %c64_i32_22 : i32 to vector<16x64xi32>
    %51 = arith.select %49, %47, %50 : vector<16x64xi1>, vector<16x64xi32>
    %cst_23 = arith.constant dense<2147483647> : vector<16xi32>
    %52 = vector.multi_reduction <minsi>, %51, %cst_23 [1] : vector<16x64xi32> to vector<16xi32>
    %53 = vector.shape_cast %52 : vector<16xi32> to vector<16x1xi32>
    %54 = vector.broadcast %53 : vector<16x1xi32> to vector<16x64xi32>
    %55 = arith.cmpi eq, %47, %54 : vector<16x64xi32>
    %56 = arith.extui %55 : vector<16x64xi1> to vector<16x64xi32>
    %57 = arith.sitofp %56 : vector<16x64xi32> to vector<16x64xf32>
    %cst_24 = arith.constant dense<0.000000e+00> : vector<16x32xf32>
    %58 = tpu.matmul %57, %38, %cst_24 {dimension_numbers = #tpu.dot_dimension_numbers<[1], [0], [0], [1], [0, 0, 1, 1], [], []>} : vector<16x64xf32>, vector<64x32xf32>, vector<16x32xf32> -> vector<16x32xf32>
    %59 = arith.subf %26, %58 : vector<16x32xf32>
    %60 = arith.mulf %59, %59 : vector<16x32xf32>
    %cst_25 = arith.constant dense<0.000000e+00> : vector<16xf32>
    %61 = vector.multi_reduction <add>, %60, %cst_25 [1] : vector<16x32xf32> to vector<16xf32>
    %62 = vector.shape_cast %61 : vector<16xf32> to vector<16x1xf32>
    %63 = arith.addf %30, %62 : vector<16x1xf32>
    %64 = vector.shape_cast %52 : vector<16xi32> to vector<1x16xi32>
    %c1_26 = arith.constant 1 : index
    %c0_27 = arith.constant 0 : index
    %65 = vector.load %arg5[%c1_26, %c0_27] : memref<2x16xi32, #tpu.memory_space<vmem>>, vector<1x16xi32>
    tpu.vector_store %arg5[%c1_26, %c0_27], %64 {strides = array<i32>} : memref<2x16xi32, #tpu.memory_space<vmem>>, vector<1x16xi32>,
    %cst_28 = arith.constant dense<0.000000e+00> : vector<1x64xf32>
    %66 = tpu.matmul %2, %57, %cst_28 {dimension_numbers = #tpu.dot_dimension_numbers<[1], [0], [0], [1], [0, 0, 1, 1], [], []>} : vector<1x16xf32>, vector<16x64xf32>, vector<1x64xf32> -> vector<1x64xf32>
    %c0_29 = arith.constant 0 : index
    %c1_30 = arith.constant 1 : index
    %c0_31 = arith.constant 0 : index
    %67 = vector.load %arg7[%c0_29, %c1_30, %c0_31] : memref<1x2x64xf32, #tpu.memory_space<vmem>>, vector<1x1x64xf32>
    %68 = vector.shape_cast %67 : vector<1x1x64xf32> to vector<1x64xf32>
    %69 = vector.shape_cast %66 : vector<1x64xf32> to vector<1x1x64xf32>
    tpu.vector_store %arg7[%c0_29, %c1_30, %c0_31], %69 {strides = array<i32>} : memref<1x2x64xf32, #tpu.memory_space<vmem>>, vector<1x1x64xf32>,
    %70 = arith.subf %0, %59 : vector<16x32xf32>
    %c0_32 = arith.constant 0 : index
    %c0_33 = arith.constant 0 : index
    %71 = vector.load %arg4[%c0_32, %c0_33] : memref<16x32xf32, #tpu.memory_space<vmem>>, vector<16x32xf32>
    tpu.vector_store %arg4[%c0_32, %c0_33], %70 {strides = array<i32>} : memref<16x32xf32, #tpu.memory_space<vmem>>, vector<16x32xf32>,
    %cst_34 = arith.constant dense<0.000000e+00> : vector<1x1xf32>
    %72 = tpu.matmul %2, %63, %cst_34 {dimension_numbers = #tpu.dot_dimension_numbers<[1], [0], [0], [1], [0, 0, 1, 1], [], []>} : vector<1x16xf32>, vector<16x1xf32>, vector<1x1xf32> -> vector<1x1xf32>
    %73 = vector.shape_cast %72 : vector<1x1xf32> to vector<1x1x1xf32>
    %74 = vector.shape_cast %73 : vector<1x1x1xf32> to vector<1x1x1xf32>
    %75 = vector.broadcast %74 : vector<1x1x1xf32> to vector<1x1x128xf32>
    %c0_35 = arith.constant 0 : index
    %c0_36 = arith.constant 0 : index
    %c0_37 = arith.constant 0 : index
    %76 = vector.load %arg6[%c0_35, %c0_36, %c0_37] : memref<1x1x128xf32, #tpu.memory_space<vmem>>, vector<1x1x128xf32>
    tpu.vector_store %arg6[%c0_35, %c0_36, %c0_37], %75 {strides = array<i32>} : memref<1x1x128xf32, #tpu.memory_space<vmem>>, vector<1x1x128xf32>,
    return
  }
  func.func @transform_0(%arg0: i32) -> (i32, i32) {
    %c0_i32 = arith.constant 0 : i32
    %c0_i32_0 = arith.constant 0 : i32
    return %arg0, %c0_i32 : i32, i32
  }
  func.func @transform_1(%arg0: i32) -> (i32, i32, i32) {
    %c0_i32 = arith.constant 0 : i32
    %c0_i32_0 = arith.constant 0 : i32
    %c0_i32_1 = arith.constant 0 : i32
    %c0_i32_2 = arith.constant 0 : i32
    return %c0_i32, %c0_i32_0, %c0_i32_1 : i32, i32, i32
  }
  func.func @transform_2(%arg0: i32) -> (i32, i32) {
    %c0_i32 = arith.constant 0 : i32
    %c0_i32_0 = arith.constant 0 : i32
    %c0_i32_1 = arith.constant 0 : i32
    return %c0_i32, %c0_i32_0 : i32, i32
  }
  func.func @transform_3(%arg0: i32) -> (i32, i32) {
    %c0_i32 = arith.constant 0 : i32
    %c0_i32_0 = arith.constant 0 : i32
    return %arg0, %c0_i32 : i32, i32
  }
  func.func @transform_4(%arg0: i32) -> (i32, i32) {
    %c0_i32 = arith.constant 0 : i32
    %c0_i32_0 = arith.constant 0 : i32
    return %c0_i32, %arg0 : i32, i32
  }
  func.func @transform_5(%arg0: i32) -> (i32, i32, i32) {
    %c0_i32 = arith.constant 0 : i32
    %c0_i32_0 = arith.constant 0 : i32
    %c0_i32_1 = arith.constant 0 : i32
    return %arg0, %c0_i32, %c0_i32_0 : i32, i32, i32
  }
  func.func @transform_6(%arg0: i32) -> (i32, i32, i32) {
    %c0_i32 = arith.constant 0 : i32
    %c0_i32_0 = arith.constant 0 : i32
    %c0_i32_1 = arith.constant 0 : i32
    return %arg0, %c0_i32, %c0_i32_0 : i32, i32, i32
  }
}

module attributes {stable_mosaic.version = 11 : i64} {
  func.func @_residual_quantize_kernel(%arg0: i32, %arg1: memref<16x32xf32, #tpu.memory_space<vmem>>, %arg2: memref<2x64x32xf32, #tpu.memory_space<vmem>>, %arg3: memref<2x64xf32, #tpu.memory_space<vmem>>, %arg4: memref<16x32xf32, #tpu.memory_space<vmem>>, %arg5: memref<2x16xi32, #tpu.memory_space<vmem>>, %arg6: memref<1x1x128xf32, #tpu.memory_space<vmem>>, %arg7: memref<1x2x64xf32, #tpu.memory_space<vmem>>) attributes {dimension_semantics = [#tpu.dimension_semantics<parallel>], iteration_bounds = array<i64: 1>, scalar_prefetch = 0 : i64, scratch_operands = 0 : i64, tpu.core_type = #tpu.core_type<tc>, window_params = [{transform_indices = @transform_0, window_bounds = array<i64: 16, 32>}, {pipeline_mode = #tpu.pipeline_mode<synchronous>, transform_indices = @transform_1, window_bounds = array<i64: 2, 64, 32>}, {pipeline_mode = #tpu.pipeline_mode<synchronous>, transform_indices = @transform_2, window_bounds = array<i64: 2, 64>}, {transform_indices = @transform_3, window_bounds = array<i64: 16, 32>}, {transform_indices = @transform_4, window_bounds = array<i64: 2, 16>}, {transform_indices = @transform_5, window_bounds = array<i64: 1, 1, 128>}, {transform_indices = @transform_6, window_bounds = array<i64: 1, 2, 64>}]} {
    %c0 = arith.constant 0 : index
    %c0_0 = arith.constant 0 : index
    %0 = vector.load %arg1[%c0, %c0_0] : memref<16x32xf32, #tpu.memory_space<vmem>>, vector<16x32xf32>
    %c0_1 = arith.constant 0 : index
    %c0_2 = arith.constant 0 : index
    %1 = vector.load %arg3[%c0_1, %c0_2] : memref<2x64xf32, #tpu.memory_space<vmem>>, vector<2x64xf32>
    %cst = arith.constant 1.000000e+00 : f32
    %2 = vector.broadcast %cst : f32 to vector<1x16xf32>
    %cst_3 = arith.constant 0.000000e+00 : f32
    %3 = vector.broadcast %cst_3 : f32 to vector<16x1xf32>
    %c0_4 = arith.constant 0 : index
    %c0_5 = arith.constant 0 : index
    %c0_6 = arith.constant 0 : index
    %4 = vector.load %arg2[%c0_4, %c0_5, %c0_6] : memref<2x64x32xf32, #tpu.memory_space<vmem>>, vector<1x64x32xf32>
    %5 = vector.shape_cast %4 : vector<1x64x32xf32> to vector<64x32xf32>
    %cst_7 = arith.constant dense<0.000000e+00> : vector<16x64xf32>
    %6 = tpu.matmul %0, %5, %cst_7 {dimension_numbers = #tpu.dot_dimension_numbers<[1], [1], [0], [0], [0, 0, 1, 0], [], []>} : vector<16x32xf32>, vector<64x32xf32>, vector<16x64xf32> -> vector<16x64xf32>
    %7 = vector.extract_strided_slice %1 {offsets = [0, 0], sizes = [1, 64], strides = [1, 1]} : vector<2x64xf32> to vector<1x64xf32>
    %8 = vector.shape_cast %7 : vector<1x64xf32> to vector<64xf32>
    %9 = vector.shape_cast %8 : vector<64xf32> to vector<1x64xf32>
    %10 = vector.broadcast %9 : vector<1x64xf32> to vector<16x64xf32>
    %11 = arith.subf %10, %6 : vector<16x64xf32>
    %cst_8 = arith.constant dense<0x7F800000> : vector<16xf32>
    %12 = vector.multi_reduction <minimumf>, %11, %cst_8 [1] : vector<16x64xf32> to vector<16xf32>
    %13 = vector.shape_cast %12 : vector<16xf32> to vector<16x1xf32>
    %14 = tpu.iota {dimensions = array<i32: 1>} : vector<16x64xi32>
    %15 = vector.broadcast %13 : vector<16x1xf32> to vector<16x64xf32>
    %16 = arith.cmpf ole, %11, %15 : vector<16x64xf32>
    %c64_i32 = arith.constant 64 : i32
    %17 = vector.broadcast %c64_i32 : i32 to vector<16x64xi32>
    %18 = arith.select %16, %14, %17 : vector<16x64xi1>, vector<16x64xi32>
    %cst_9 = arith.constant dense<2147483647> : vector<16xi32>
    %19 = vector.multi_reduction <minsi>, %18, %cst_9 [1] : vector<16x64xi32> to vector<16xi32>
    %20 = vector.shape_cast %19 : vector<16xi32> to vector<16x1xi32>
    %21 = vector.broadcast %20 : vector<16x1xi32> to vector<16x64xi32>
    %22 = arith.cmpi eq, %14, %21 : vector<16x64xi32>
    %23 = arith.extui %22 : vector<16x64xi1> to vector<16x64xi32>
    %24 = arith.sitofp %23 : vector<16x64xi32> to vector<16x64xf32>
    %cst_10 = arith.constant dense<0.000000e+00> : vector<16x32xf32>
    %25 = tpu.matmul %24, %5, %cst_10 {dimension_numbers = #tpu.dot_dimension_numbers<[1], [0], [0], [1], [0, 0, 1, 1], [], []>} : vector<16x64xf32>, vector<64x32xf32>, vector<16x32xf32> -> vector<16x32xf32>
    %26 = arith.subf %0, %25 : vector<16x32xf32>
    %27 = arith.mulf %26, %26 : vector<16x32xf32>
    %cst_11 = arith.constant dense<0.000000e+00> : vector<16xf32>
    %28 = vector.multi_reduction <add>, %27, %cst_11 [1] : vector<16x32xf32> to vector<16xf32>
    %29 = vector.shape_cast %28 : vector<16xf32> to vector<16x1xf32>
    %30 = arith.addf %3, %29 : vector<16x1xf32>
    %31 = vector.shape_cast %19 : vector<16xi32> to vector<1x16xi32>
    %c0_12 = arith.constant 0 : index
    %c0_13 = arith.constant 0 : index
    %32 = vector.load %arg5[%c0_12, %c0_13] : memref<2x16xi32, #tpu.memory_space<vmem>>, vector<1x16xi32>
    tpu.vector_store %arg5[%c0_12, %c0_13], %31 {strides = array<i32>} : memref<2x16xi32, #tpu.memory_space<vmem>>, vector<1x16xi32>,
    %cst_14 = arith.constant dense<0.000000e+00> : vector<1x64xf32>
    %33 = tpu.matmul %2, %24, %cst_14 {dimension_numbers = #tpu.dot_dimension_numbers<[1], [0], [0], [1], [0, 0, 1, 1], [], []>} : vector<1x16xf32>, vector<16x64xf32>, vector<1x64xf32> -> vector<1x64xf32>
    %c0_15 = arith.constant 0 : index
    %c0_16 = arith.constant 0 : index
    %c0_17 = arith.constant 0 : index
    %34 = vector.load %arg7[%c0_15, %c0_16, %c0_17] : memref<1x2x64xf32, #tpu.memory_space<vmem>>, vector<1x1x64xf32>
    %35 = vector.shape_cast %34 : vector<1x1x64xf32> to vector<1x64xf32>
    %36 = vector.shape_cast %33 : vector<1x64xf32> to vector<1x1x64xf32>
    tpu.vector_store %arg7[%c0_15, %c0_16, %c0_17], %36 {strides = array<i32>} : memref<1x2x64xf32, #tpu.memory_space<vmem>>, vector<1x1x64xf32>,
    %c1 = arith.constant 1 : index
    %c0_18 = arith.constant 0 : index
    %c0_19 = arith.constant 0 : index
    %37 = vector.load %arg2[%c1, %c0_18, %c0_19] : memref<2x64x32xf32, #tpu.memory_space<vmem>>, vector<1x64x32xf32>
    %38 = vector.shape_cast %37 : vector<1x64x32xf32> to vector<64x32xf32>
    %cst_20 = arith.constant dense<0.000000e+00> : vector<16x64xf32>
    %39 = tpu.matmul %26, %38, %cst_20 {dimension_numbers = #tpu.dot_dimension_numbers<[1], [1], [0], [0], [0, 0, 1, 0], [], []>} : vector<16x32xf32>, vector<64x32xf32>, vector<16x64xf32> -> vector<16x64xf32>
    %40 = vector.extract_strided_slice %1 {offsets = [1, 0], sizes = [1, 64], strides = [1, 1]} : vector<2x64xf32> to vector<1x64xf32>
    %41 = vector.shape_cast %40 : vector<1x64xf32> to vector<64xf32>
    %42 = vector.shape_cast %41 : vector<64xf32> to vector<1x64xf32>
    %43 = vector.broadcast %42 : vector<1x64xf32> to vector<16x64xf32>
    %44 = arith.subf %43, %39 : vector<16x64xf32>
    %cst_21 = arith.constant dense<0x7F800000> : vector<16xf32>
    %45 = vector.multi_reduction <minimumf>, %44, %cst_21 [1] : vector<16x64xf32> to vector<16xf32>
    %46 = vector.shape_cast %45 : vector<16xf32> to vector<16x1xf32>
    %47 = tpu.iota {dimensions = array<i32: 1>} : vector<16x64xi32>
    %48 = vector.broadcast %46 : vector<16x1xf32> to vector<16x64xf32>
    %49 = arith.cmpf ole, %44, %48 : vector<16x64xf32>
    %c64_i32_22 = arith.constant 64 : i32
    %50 = vector.broadcast %c64_i32_22 : i32 to vector<16x64xi32>
    %51 = arith.select %49, %47, %50 : vector<16x64xi1>, vector<16x64xi32>
    %cst_23 = arith.constant dense<2147483647> : vector<16xi32>
    %52 = vector.multi_reduction <minsi>, %51, %cst_23 [1] : vector<16x64xi32> to vector<16xi32>
    %53 = vector.shape_cast %52 : vector<16xi32> to vector<16x1xi32>
    %54 = vector.broadcast %53 : vector<16x1xi32> to vector<16x64xi32>
    %55 = arith.cmpi eq, %47, %54 : vector<16x64xi32>
    %56 = arith.extui %55 : vector<16x64xi1> to vector<16x64xi32>
    %57 = arith.sitofp %56 : vector<16x64xi32> to vector<16x64xf32>
    %cst_24 = arith.constant dense<0.000000e+00> : vector<16x32xf32>
    %58 = tpu.matmul %57, %38, %cst_24 {dimension_numbers = #tpu.dot_dimension_numbers<[1], [0], [0], [1], [0, 0, 1, 1], [], []>} : vector<16x64xf32>, vector<64x32xf32>, vector<16x32xf32> -> vector<16x32xf32>
    %59 = arith.subf %26, %58 : vector<16x32xf32>
    %60 = arith.mulf %59, %59 : vector<16x32xf32>
    %cst_25 = arith.constant dense<0.000000e+00> : vector<16xf32>
    %61 = vector.multi_reduction <add>, %60, %cst_25 [1] : vector<16x32xf32> to vector<16xf32>
    %62 = vector.shape_cast %61 : vector<16xf32> to vector<16x1xf32>
    %63 = arith.addf %30, %62 : vector<16x1xf32>
    %64 = vector.shape_cast %52 : vector<16xi32> to vector<1x16xi32>
    %c1_26 = arith.constant 1 : index
    %c0_27 = arith.constant 0 : index
    %65 = vector.load %arg5[%c1_26, %c0_27] : memref<2x16xi32, #tpu.memory_space<vmem>>, vector<1x16xi32>
    tpu.vector_store %arg5[%c1_26, %c0_27], %64 {strides = array<i32>} : memref<2x16xi32, #tpu.memory_space<vmem>>, vector<1x16xi32>,
    %cst_28 = arith.constant dense<0.000000e+00> : vector<1x64xf32>
    %66 = tpu.matmul %2, %57, %cst_28 {dimension_numbers = #tpu.dot_dimension_numbers<[1], [0], [0], [1], [0, 0, 1, 1], [], []>} : vector<1x16xf32>, vector<16x64xf32>, vector<1x64xf32> -> vector<1x64xf32>
    %c0_29 = arith.constant 0 : index
    %c1_30 = arith.constant 1 : index
    %c0_31 = arith.constant 0 : index
    %67 = vector.load %arg7[%c0_29, %c1_30, %c0_31] : memref<1x2x64xf32, #tpu.memory_space<vmem>>, vector<1x1x64xf32>
    %68 = vector.shape_cast %67 : vector<1x1x64xf32> to vector<1x64xf32>
    %69 = vector.shape_cast %66 : vector<1x64xf32> to vector<1x1x64xf32>
    tpu.vector_store %arg7[%c0_29, %c1_30, %c0_31], %69 {strides = array<i32>} : memref<1x2x64xf32, #tpu.memory_space<vmem>>, vector<1x1x64xf32>,
    %70 = arith.subf %0, %59 : vector<16x32xf32>
    %c0_32 = arith.constant 0 : index
    %c0_33 = arith.constant 0 : index
    %71 = vector.load %arg4[%c0_32, %c0_33] : memref<16x32xf32, #tpu.memory_space<vmem>>, vector<16x32xf32>
    tpu.vector_store %arg4[%c0_32, %c0_33], %70 {strides = array<i32>} : memref<16x32xf32, #tpu.memory_space<vmem>>, vector<16x32xf32>,
    %cst_34 = arith.constant dense<0.000000e+00> : vector<1x1xf32>
    %72 = tpu.matmul %2, %63, %cst_34 {dimension_numbers = #tpu.dot_dimension_numbers<[1], [0], [0], [1], [0, 0, 1, 1], [], []>} : vector<1x16xf32>, vector<16x1xf32>, vector<1x1xf32> -> vector<1x1xf32>
    %73 = vector.shape_cast %72 : vector<1x1xf32> to vector<1x1x1xf32>
    %74 = vector.shape_cast %73 : vector<1x1x1xf32> to vector<1x1x1xf32>
    %75 = vector.broadcast %74 : vector<1x1x1xf32> to vector<1x1x128xf32>
    %c0_35 = arith.constant 0 : index
    %c0_36 = arith.constant 0 : index
    %c0_37 = arith.constant 0 : index
    %76 = vector.load %arg6[%c0_35, %c0_36, %c0_37] : memref<1x1x128xf32, #tpu.memory_space<vmem>>, vector<1x1x128xf32>
    tpu.vector_store %arg6[%c0_35, %c0_36, %c0_37], %75 {strides = array<i32>} : memref<1x1x128xf32, #tpu.memory_space<vmem>>, vector<1x1x128xf32>,
    return
  }
  func.func @transform_0(%arg0: i32) -> (i32, i32) {
    %c0_i32 = arith.constant 0 : i32
    %c0_i32_0 = arith.constant 0 : i32
    return %arg0, %c0_i32 : i32, i32
  }
  func.func @transform_1(%arg0: i32) -> (i32, i32, i32) {
    %c0_i32 = arith.constant 0 : i32
    %c0_i32_0 = arith.constant 0 : i32
    %c0_i32_1 = arith.constant 0 : i32
    %c0_i32_2 = arith.constant 0 : i32
    return %c0_i32, %c0_i32_0, %c0_i32_1 : i32, i32, i32
  }
  func.func @transform_2(%arg0: i32) -> (i32, i32) {
    %c0_i32 = arith.constant 0 : i32
    %c0_i32_0 = arith.constant 0 : i32
    %c0_i32_1 = arith.constant 0 : i32
    return %c0_i32, %c0_i32_0 : i32, i32
  }
  func.func @transform_3(%arg0: i32) -> (i32, i32) {
    %c0_i32 = arith.constant 0 : i32
    %c0_i32_0 = arith.constant 0 : i32
    return %arg0, %c0_i32 : i32, i32
  }
  func.func @transform_4(%arg0: i32) -> (i32, i32) {
    %c0_i32 = arith.constant 0 : i32
    %c0_i32_0 = arith.constant 0 : i32
    return %c0_i32, %arg0 : i32, i32
  }
  func.func @transform_5(%arg0: i32) -> (i32, i32, i32) {
    %c0_i32 = arith.constant 0 : i32
    %c0_i32_0 = arith.constant 0 : i32
    %c0_i32_1 = arith.constant 0 : i32
    return %arg0, %c0_i32, %c0_i32_0 : i32, i32, i32
  }
  func.func @transform_6(%arg0: i32) -> (i32, i32, i32) {
    %c0_i32 = arith.constant 0 : i32
    %c0_i32_0 = arith.constant 0 : i32
    %c0_i32_1 = arith.constant 0 : i32
    return %arg0, %c0_i32, %c0_i32_0 : i32, i32, i32
  }
}

</mosaic_0001>

<llo_original>
// kernel: tpu_custom_call.1
$region0: #{tpu_custom_call.1}
  #allocation0 [shape = 'u32[]', space=smem, size = 0x4, offset = 0x4, fixed_abs, tag = 'smem constant byte address 0x4 - core index']
  #allocation1 [shape = 'u32[144,128]{1,0:T(1,128)}', space=vmem, size = 0x12000, scoped, tag = 'internal scratch']
  %s0 = inlined_call_operand.vmem [shape: f32[16,32], index: 0, kind: input, shape index: {}]
  %s1 = inlined_call_operand.vmem [shape: f32[2,64,32], index: 1, kind: input, shape index: {}]
  %s2 = inlined_call_operand.vmem [shape: f32[2,64], index: 2, kind: input, shape index: {}]
  %s3 = inlined_call_operand.hbm [shape: f32[16,32], index: 3, kind: output, shape index: {0}]
  %s4 = inlined_call_operand.hbm [shape: s32[2,16], index: 4, kind: output, shape index: {1}]
  %s5 = inlined_call_operand.hbm [shape: f32[1,1,128], index: 5, kind: output, shape index: {2}]
  %s6 = inlined_call_operand.hbm [shape: f32[1,2,64], index: 6, kind: output, shape index: {3}]
  %7 = xla_tuple %s3, %s4, %s5, %s6
  %s8 = sld [smem:[#allocation0]]
  $region46: #{tpu_custom_call.1} parent=0
    _
  %s10 = ssub.s32 1, %s8
  %s11 = scalar_select 0, %s10, %s8
  $region1: #{tpu_custom_call.1} parent=0
    #allocation2 [shape = 'u8[8192]{0}', space=vmem, size = 0x2000, scoped, tag = 'output window, operand 0, single buffered']
    #allocation3 [shape = 's32[1]{0}', space=sflag, size = 0x4, scoped, tag = 'scoped memory for tpu_custom_call.1']
    #allocation4 [shape = 'u8[1024]{0}', space=vmem, size = 0x400, scoped, tag = 'output window, operand 1, single buffered']
    #allocation5 [shape = 's32[1]{0}', space=sflag, size = 0x4, scoped, tag = 'scoped memory for tpu_custom_call.1']
    #allocation6 [shape = 'u8[512]{0}', space=vmem, size = 0x400, scoped, tag = 'output window, operand 2, single buffered']
    #allocation7 [shape = 'u8[1024]{0}', space=vmem, size = 0x400, scoped, tag = 'output window, operand 3, single buffered']
    #allocation8 [shape = 's32[1]{0}', space=sflag, size = 0x4, scoped, tag = 'scoped memory for tpu_custom_call.1']
    %12 = vsyncpa [#allocation3], 0
    %13 = vsyncpa [#allocation5], 0
    %14 = vsyncpa [#allocation8], 0
    // Predicated region
    $region2: #{tpu_custom_call.1} parent=1 // pred_check
      _
    $region3: #{tpu_custom_call.1} parent=1 // pred_check_branch
      %16 = sbr.rel (0) target = $region5
    $region4: #{tpu_custom_call.1} parent=1 // pred_region
      _
    $region5: #{tpu_custom_call.1} parent=1 // pred_fallthru
      _
    // Predicated region
    $region6: #{tpu_custom_call.1} parent=1 // pred_check
      _
    $region7: #{tpu_custom_call.1} parent=1 // pred_check_branch
      %18 = sbr.rel (0) target = $region9
    $region8: #{tpu_custom_call.1} parent=1 // pred_region
      _
    $region9: #{tpu_custom_call.1} parent=1 // pred_fallthru
      _
    // Predicated region
    $region10: #{tpu_custom_call.1} parent=1 // pred_check
      _
    $region11: #{tpu_custom_call.1} parent=1 // pred_check_branch
      %20 = sbr.rel (0) target = $region13
    $region12: #{tpu_custom_call.1} parent=1 // pred_region
      _
    $region13: #{tpu_custom_call.1} parent=1 // pred_fallthru
      _
    %v21 = vld [vmem:[%s0] sm:$0xff]
    %v22 = vld [vmem:[%s0 + $0x8] sm:$0xff]
    %v23 = vld [vmem:[%s2] sm:$0x3]
    %v24 = vld [vmem:[%s1] sm:$0xff]
    %v25 = vld [vmem:[%s1 + $0x8] sm:$0xff]
    %v26 = vld [vmem:[%s1 + $0x10] sm:$0xff]
    %v27 = vld [vmem:[%s1 + $0x18] sm:$0xff]
    %v28 = vld [vmem:[%s1 + $0x20] sm:$0xff]
    %v29 = vld [vmem:[%s1 + $0x28] sm:$0xff]
    %v30 = vld [vmem:[%s1 + $0x30] sm:$0xff]
    %v31 = vld [vmem:[%s1 + $0x38] sm:$0xff]
    %vm32 = vcmask 261120
    %v34 = vsel %vm32, %v21, 0
    %v37 = vsel %vm32, %v22, 0
    %v40 = vsel %vm32, %v24, 0
    %v43 = vsel %vm32, %v25, 0
    %v46 = vsel %vm32, %v26, 0
    %v49 = vsel %vm32, %v27, 0
    %v52 = vsel %vm32, %v28, 0
    %v55 = vsel %vm32, %v29, 0
    %v58 = vsel %vm32, %v30, 0
    %v61 = vsel %vm32, %v31, 0
    %63 = vmatprep.subr.mxu0 0.0
    %64 = vmatpush1.xpose.msra.mxu0 %v40
    %65 = vmatprep.subr.mxu0 0.0
    %66 = vmatpush1.xpose.msra.mxu0 %v43
    %67 = vmatprep.subr.mxu0 0.0
    %68 = vmatpush1.xpose.msra.mxu0 %v46
    %69 = vmatprep.subr.mxu0 0.0
    %70 = vmatpush1.xpose.msra.mxu0 %v49
    %71 = vmatprep.subr.mxu0 0.0
    %72 = vmatpush1.xpose.msra.mxu0 %v52
    %73 = vmatprep.subr.mxu0 0.0
    %74 = vmatpush1.xpose.msra.mxu0 %v55
    %75 = vmatprep.subr.mxu0 0.0
    %76 = vmatpush1.xpose.msra.mxu0 %v58
    %77 = vmatprep.subr.mxu0 0.0
    %78 = vmatpush1.xpose.msra.mxu0 %v61
    %79 = vmatprep.subr.mxu0 0.0
    %80 = vmatpush1.xpose.msra.mxu0 0.0
    %81 = vmatprep.subr.mxu0 0.0
    %82 = vmatpush1.xpose.msra.mxu0 0.0
    %83 = vmatprep.subr.mxu0 0.0
    %84 = vmatpush1.xpose.msra.mxu0 0.0
    %85 = vmatprep.subr.mxu0 0.0
    %86 = vmatpush1.xpose.msra.mxu0 0.0
    %87 = vmatprep.subr.mxu0 0.0
    %88 = vmatpush1.xpose.msra.mxu0 0.0
    %89 = vmatprep.subr.mxu0 0.0
    %90 = vmatpush1.xpose.msra.mxu0 0.0
    %91 = vmatprep.subr.mxu0 0.0
    %92 = vmatpush1.xpose.msra.mxu0 0.0
    %93 = vmatprep.subr.mxu0 0.0
    %94 = vmatpush1.xpose.msra.mxu0 0.0
    %95 = vmatprep.subr.mxu0 0.0
    %96 = vmatpush1.xpose.msra.mxu0 0.0
    %97 = vmatprep.subr.mxu0 0.0
    %98 = vmatpush1.xpose.msra.mxu0 0.0
    %99 = vmatprep.subr.mxu0 0.0
    %100 = vmatpush1.xpose.msra.mxu0 0.0
    %101 = vmatprep.subr.mxu0 0.0
    %102 = vmatpush1.xpose.msra.mxu0 0.0
    %103 = vmatprep.subr.mxu0 0.0
    %104 = vmatpush1.xpose.msra.mxu0 0.0
    %105 = vmatprep.subr.mxu0 0.0
    %106 = vmatpush1.xpose.msra.mxu0 0.0
    %107 = vmatprep.subr.mxu0 0.0
    %108 = vmatpush1.xpose.msra.mxu0 0.0
    %109 = vmatprep.subr.mxu0 0.0
    %110 = vmatpush1.xpose.msra.mxu0 0.0
    %111 = vmatprep.subr.mxu0 0.0
    %112 = vmatpush1.xpose.msra.mxu0 0.0
    %113 = vmatprep.subr.mxu0 0.0
    %114 = vmatpush1.xpose.msra.mxu0 0.0
    %115 = vmatprep.subr.mxu0 0.0
    %116 = vmatpush1.xpose.msra.mxu0 0.0
    %117 = vmatprep.subr.mxu0 0.0
    %118 = vmatpush1.xpose.msra.mxu0 0.0
    %119 = vmatprep.subr.mxu0 0.0
    %120 = vmatpush1.xpose.msra.mxu0 0.0
    %121 = vmatprep.subr.mxu0 0.0
    %122 = vmatpush1.xpose.msra.mxu0 0.0
    %123 = vmatprep.subr.mxu0 0.0
    %124 = vmatpush1.xpose.msra.mxu0 0.0
    %125 = vmatprep.subr.mxu0 0.0
    %126 = vmatpush1.xpose.msra.mxu0 0.0
    %127 = vmatprep.mubr.f32.mxu0 0.0
    %128 = vmatmul.mubr.f32.gmra.mrb[0].mxu0 %v34
    %v129 = vpop.f32.mrb[0].mxu0
    %v130 = vadd.f32 0.0, %v129
    %v131 = vpop.f32.mrb[0].mxu0
    %132 = vmatprep.mubr.f32.mxu0 0.0
    %133 = vmatmul.mubr.f32.gmra.mrb[0].mxu0 %v37
    %v134 = vpop.f32.mrb[0].mxu0
    %v135 = vadd.f32 0.0, %v134
    %v136 = vpop.f32.mrb[0].mxu0
    %137 = vdwg.mxu0
    %v138 = vlaneseq
    %v139 = vshrl.u32 %v138, 7
    %v140 = vsub.s32 0, %v139
    %v141 = vrot.slane %v23, %v140
    %v142 = vsub.f32 %v141, %v130
    %v143 = vsub.f32 %v141, %v135
    %vm144 = vcmask 523264
    %v145 = vsel %vm144, %v142, inf
    %146 = vmin.xlane.f32.xlu0 %v145
    %v147 = vpop.xlane.xlu0 %146
    %v148 = vsel %vm144, %v143, inf
    %149 = vmin.xlane.f32.xlu0 %v148
    %v150 = vpop.xlane.xlu0 %149
    %v151 = vlaneseq
    %v152 = vand.u32 %v151, 127
    %vm153 = vcmp.le.f32.partialorder %v142, %v147
    %vm154 = vcmp.le.f32.partialorder %v143, %v150
    %v155 = vsel %vm153, %v152, 64
    %v156 = vsel %vm154, %v152, 64
    %v157 = vsel %vm144, %v155, 2147483647
    %v158 = vand.u32 %v157, 65535
    %v159 = vshra.s32 %v157, 16
    %v160 = vcvt.s32.f32 %v158
    %v161 = vcvt.s32.f32 %v159
    %162 = vmin.xlane.f32.xlu0 %v161
    %v163 = vpop.xlane.xlu0 %162
    %vm164 = vcmp.eq.f32.partialorder %v161, %v163
    %v165 = vsel %vm164, %v160, inf
    %166 = vmin.xlane.f32.xlu0 %v165
    %v167 = vpop.xlane.xlu0 %166
    %v168 = vcvt.f32.s32 %v167
    %v169 = vcvt.f32.s32 %v163
    %v170 = vshll.u32 %v169, 16
    %v171 = vadd.s32 %v170, %v168
    %v172 = vsel %vm144, %v156, 2147483647
    %v173 = vand.u32 %v172, 65535
    %v174 = vshra.s32 %v172, 16
    %v175 = vcvt.s32.f32 %v173
    %v176 = vcvt.s32.f32 %v174
    %177 = vmin.xlane.f32.xlu0 %v176
    %v178 = vpop.xlane.xlu0 %177
    %vm179 = vcmp.eq.f32.partialorder %v176, %v178
    %v180 = vsel %vm179, %v175, inf
    %181 = vmin.xlane.f32.xlu0 %v180
    %v182 = vpop.xlane.xlu0 %181
    %v183 = vcvt.f32.s32 %v182
    %v184 = vcvt.f32.s32 %v178
    %v185 = vshll.u32 %v184, 16
    %v186 = vadd.s32 %v185, %v183
    %vm187 = vcmp.eq.s32.totalorder %v152, %v171
    %vm188 = vcmp.eq.s32.totalorder %v152, %v186
    %v189 = vsel %vm187, 1, 0
    %v190 = vsel %vm188, 1, 0
    %v191 = vcvt.s32.f32 %v189
    %v192 = vcvt.s32.f32 %v190
    %v194 = vsel %vm144, %v191, 0
    %v197 = vsel %vm144, %v192, 0
    %199 = vmatprep.subr.mxu0 0.0
    %200 = vmatpush1.msra.mxu0 %v24
    %201 = vmatprep.subr.mxu0 0.0
    %202 = vmatpush1.msra.mxu0 %v25
    %203 = vmatprep.subr.mxu0 0.0
    %204 = vmatpush1.msra.mxu0 %v26
    %205 = vmatprep.subr.mxu0 0.0
    %206 = vmatpush1.msra.mxu0 %v27
    %207 = vmatprep.subr.mxu0 0.0
    %208 = vmatpush1.msra.mxu0 %v28
    %209 = vmatprep.subr.mxu0 0.0
    %210 = vmatpush1.msra.mxu0 %v29
    %211 = vmatprep.subr.mxu0 0.0
    %212 = vmatpush1.msra.mxu0 %v30
    %213 = vmatprep.subr.mxu0 0.0
    %214 = vmatpush1.msra.mxu0 %v31
    %215 = vmatprep.subr.mxu0 0.0
    %216 = vmatpush1.msra.mxu0 0.0
    %217 = vmatprep.subr.mxu0 0.0
    %218 = vmatpush1.msra.mxu0 0.0
    %219 = vmatprep.subr.mxu0 0.0
    %220 = vmatpush1.msra.mxu0 0.0
    %221 = vmatprep.subr.mxu0 0.0
    %222 = vmatpush1.msra.mxu0 0.0
    %223 = vmatprep.subr.mxu0 0.0
    %224 = vmatpush1.msra.mxu0 0.0
    %225 = vmatprep.subr.mxu0 0.0
    %226 = vmatpush1.msra.mxu0 0.0
    %227 = vmatprep.subr.mxu0 0.0
    %228 = vmatpush1.msra.mxu0 0.0
    %229 = vmatprep.subr.mxu0 0.0
    %230 = vmatpush1.msra.mxu0 0.0
    %231 = vmatprep.subr.mxu0 0.0
    %232 = vmatpush1.msra.mxu0 0.0
    %233 = vmatprep.subr.mxu0 0.0
    %234 = vmatpush1.msra.mxu0 0.0
    %235 = vmatprep.subr.mxu0 0.0
    %236 = vmatpush1.msra.mxu0 0.0
    %237 = vmatprep.subr.mxu0 0.0
    %238 = vmatpush1.msra.mxu0 0.0
    %239 = vmatprep.subr.mxu0 0.0
    %240 = vmatpush1.msra.mxu0 0.0
    %241 = vmatprep.subr.mxu0 0.0
    %242 = vmatpush1.msra.mxu0 0.0
    %243 = vmatprep.subr.mxu0 0.0
    %244 = vmatpush1.msra.mxu0 0.0
    %245 = vmatprep.subr.mxu0 0.0
    %246 = vmatpush1.msra.mxu0 0.0
    %247 = vmatprep.subr.mxu0 0.0
    %248 = vmatpush1.msra.mxu0 0.0
    %249 = vmatprep.subr.mxu0 0.0
    %250 = vmatpush1.msra.mxu0 0.0
    %251 = vmatprep.subr.mxu0 0.0
    %252 = vmatpush1.msra.mxu0 0.0
    %253 = vmatprep.subr.mxu0 0.0
    %254 = vmatpush1.msra.mxu0 0.0
    %255 = vmatprep.subr.mxu0 0.0
    %256 = vmatpush1.msra.mxu0 0.0
    %257 = vmatprep.subr.mxu0 0.0
    %258 = vmatpush1.msra.mxu0 0.0
    %259 = vmatprep.subr.mxu0 0.0
    %260 = vmatpush1.msra.mxu0 0.0
    %261 = vmatprep.subr.mxu0 0.0
    %262 = vmatpush1.msra.mxu0 0.0
    %263 = vmatprep.mubr.f32.mxu0 0.0
    %264 = vmatmul.mubr.f32.gmra.mrb[0].mxu0 %v194
    %v265 = vpop.f32.mrb[0].mxu0
    %v266 = vadd.f32 0.0, %v265
    %v267 = vpop.f32.mrb[0].mxu0
    %268 = vmatprep.mubr.f32.mxu0 0.0
    %269 = vmatmul.mubr.f32.gmra.mrb[0].mxu0 %v197
    %v270 = vpop.f32.mrb[0].mxu0
    %v271 = vadd.f32 0.0, %v270
    %v272 = vpop.f32.mrb[0].mxu0
    %273 = vdwg.mxu0
    %v274 = vsub.f32 %v21, %v266
    %v275 = vsub.f32 %v22, %v271
    %v276 = vmul.f32 %v274, %v274
    %v277 = vmul.f32 %v275, %v275
    %v278 = vsel %vm32, %v276, 0.0
    %279 = vadd.xlane.f32.xlu0 %v278
    %v280 = vpop.xlane.xlu0 %279
    %v281 = vsel %vm32, %v277, 0.0
    %282 = vadd.xlane.f32.xlu0 %v281
    %v283 = vpop.xlane.xlu0 %282
    %v284 = vadd.f32 %v280, 0.0
    %v285 = vadd.f32 %v283, 0.0
    %v286 = vlaneseq
    %v287 = vshrl.u32 %v286, 7
    %v288 = vsub.s32 %v152, %v287
    %v289 = vrot.slane %v171, %v288
    %v290 = vadd.s32 %v152, 4294967288
    %v291 = vlaneseq
    %v292 = vshrl.u32 %v291, 7
    %v293 = vsub.s32 %v290, %v292
    %v294 = vrot.slane %v186, %v293
    %vm295 = vcmask 130112
    %v296 = vsel %vm295, %v294, %v289
    %vm297 = vcmask 122880
    %298 = vst.msk [vmem:[#allocation4] sm:$0x1] %vm297, %v296
    %vm299 = vcmask 130048
    %v301 = vsel %vm299, 1.0, 0
    %303 = vmatprep.subr.mxu0 0.0
    %304 = vmatpush1.msra.mxu0 %v191
    %305 = vmatprep.subr.mxu0 0.0
    %306 = vmatpush1.msra.mxu0 %v192
    %307 = vmatprep.subr.mxu0 0.0
    %308 = vmatpush1.msra.mxu0 0.0
    %309 = vmatprep.subr.mxu0 0.0
    %310 = vmatpush1.msra.mxu0 0.0
    %311 = vmatprep.subr.mxu0 0.0
    %312 = vmatpush1.msra.mxu0 0.0
    %313 = vmatprep.subr.mxu0 0.0
    %314 = vmatpush1.msra.mxu0 0.0
    %315 = vmatprep.subr.mxu0 0.0
    %316 = vmatpush1.msra.mxu0 0.0
    %317 = vmatprep.subr.mxu0 0.0
    %318 = vmatpush1.msra.mxu0 0.0
    %319 = vmatprep.subr.mxu0 0.0
    %320 = vmatpush1.msra.mxu0 0.0
    %321 = vmatprep.subr.mxu0 0.0
    %322 = vmatpush1.msra.mxu0 0.0
    %323 = vmatprep.subr.mxu0 0.0
    %324 = vmatpush1.msra.mxu0 0.0
    %325 = vmatprep.subr.mxu0 0.0
    %326 = vmatpush1.msra.mxu0 0.0
    %327 = vmatprep.subr.mxu0 0.0
    %328 = vmatpush1.msra.mxu0 0.0
    %329 = vmatprep.subr.mxu0 0.0
    %330 = vmatpush1.msra.mxu0 0.0
    %331 = vmatprep.subr.mxu0 0.0
    %332 = vmatpush1.msra.mxu0 0.0
    %333 = vmatprep.subr.mxu0 0.0
    %334 = vmatpush1.msra.mxu0 0.0
    %335 = vmatprep.subr.mxu0 0.0
    %336 = vmatpush1.msra.mxu0 0.0
    %337 = vmatprep.subr.mxu0 0.0
    %338 = vmatpush1.msra.mxu0 0.0
    %339 = vmatprep.subr.mxu0 0.0
    %340 = vmatpush1.msra.mxu0 0.0
    %341 = vmatprep.subr.mxu0 0.0
    %342 = vmatpush1.msra.mxu0 0.0
    %343 = vmatprep.subr.mxu0 0.0
    %344 = vmatpush1.msra.mxu0 0.0
    %345 = vmatprep.subr.mxu0 0.0
    %346 = vmatpush1.msra.mxu0 0.0
    %347 = vmatprep.subr.mxu0 0.0
    %348 = vmatpush1.msra.mxu0 0.0
    %349 = vmatprep.subr.mxu0 0.0
    %350 = vmatpush1.msra.mxu0 0.0
    %351 = vmatprep.subr.mxu0 0.0
    %352 = vmatpush1.msra.mxu0 0.0
    %353 = vmatprep.subr.mxu0 0.0
    %354 = vmatpush1.msra.mxu0 0.0
    %355 = vmatprep.subr.mxu0 0.0
    %356 = vmatpush1.msra.mxu0 0.0
    %357 = vmatprep.subr.mxu0 0.0
    %358 = vmatpush1.msra.mxu0 0.0
    %359 = vmatprep.subr.mxu0 0.0
    %360 = vmatpush1.msra.mxu0 0.0
    %361 = vmatprep.subr.mxu0 0.0
    %362 = vmatpush1.msra.mxu0 0.0
    %363 = vmatprep.subr.mxu0 0.0
    %364 = vmatpush1.msra.mxu0 0.0
    %365 = vmatprep.subr.mxu0 0.0
    %366 = vmatpush1.msra.mxu0 0.0
    %367 = vmatprep.mubr.f32.mxu0 0.0
    %368 = vmatmul.mubr.f32.gmra.mrb[0].mxu0 %v301
    %v369 = vpop.f32.mrb[0].mxu0
    %v370 = vadd.f32 0.0, %v369
    %v371 = vpop.f32.mrb[0].mxu0
    %372 = vdwg.mxu0
    %vm373 = vcmask 516096
    %374 = vst.msk [vmem:[#allocation7] sm:$0x1] %vm373, %v370
    %s375 = scalar_lea.vmem %s1, 64
    %v376 = vld [vmem:[%s375] sm:$0xff]
    %v377 = vld [vmem:[%s375 + $0x8] sm:$0xff]
    %v378 = vld [vmem:[%s375 + $0x10] sm:$0xff]
    %v379 = vld [vmem:[%s375 + $0x18] sm:$0xff]
    %v380 = vld [vmem:[%s375 + $0x20] sm:$0xff]
    %v381 = vld [vmem:[%s375 + $0x28] sm:$0xff]
    %v382 = vld [vmem:[%s375 + $0x30] sm:$0xff]
    %v383 = vld [vmem:[%s375 + $0x38] sm:$0xff]
    %v385 = vsel %vm32, %v274, 0
    %v388 = vsel %vm32, %v275, 0
    %v391 = vsel %vm32, %v376, 0
    %v394 = vsel %vm32, %v377, 0
    %v397 = vsel %vm32, %v378, 0
    %v400 = vsel %vm32, %v379, 0
    %v403 = vsel %vm32, %v380, 0
    %v406 = vsel %vm32, %v381, 0
    %v409 = vsel %vm32, %v382, 0
    %v412 = vsel %vm32, %v383, 0
    %414 = vmatprep.subr.mxu0 0.0
    %415 = vmatpush1.xpose.msra.mxu0 %v391
    %416 = vmatprep.subr.mxu0 0.0
    %417 = vmatpush1.xpose.msra.mxu0 %v394
    %418 = vmatprep.subr.mxu0 0.0
    %419 = vmatpush1.xpose.msra.mxu0 %v397
    %420 = vmatprep.subr.mxu0 0.0
    %421 = vmatpush1.xpose.msra.mxu0 %v400
    %422 = vmatprep.subr.mxu0 0.0
    %423 = vmatpush1.xpose.msra.mxu0 %v403
    %424 = vmatprep.subr.mxu0 0.0
    %425 = vmatpush1.xpose.msra.mxu0 %v406
    %426 = vmatprep.subr.mxu0 0.0
    %427 = vmatpush1.xpose.msra.mxu0 %v409
    %428 = vmatprep.subr.mxu0 0.0
    %429 = vmatpush1.xpose.msra.mxu0 %v412
    %430 = vmatprep.subr.mxu0 0.0
    %431 = vmatpush1.xpose.msra.mxu0 0.0
    %432 = vmatprep.subr.mxu0 0.0
    %433 = vmatpush1.xpose.msra.mxu0 0.0
    %434 = vmatprep.subr.mxu0 0.0
    %435 = vmatpush1.xpose.msra.mxu0 0.0
    %436 = vmatprep.subr.mxu0 0.0
    %437 = vmatpush1.xpose.msra.mxu0 0.0
    %438 = vmatprep.subr.mxu0 0.0
    %439 = vmatpush1.xpose.msra.mxu0 0.0
    %440 = vmatprep.subr.mxu0 0.0
    %441 = vmatpush1.xpose.msra.mxu0 0.0
    %442 = vmatprep.subr.mxu0 0.0
    %443 = vmatpush1.xpose.msra.mxu0 0.0
    %444 = vmatprep.subr.mxu0 0.0
    %445 = vmatpush1.xpose.msra.mxu0 0.0
    %446 = vmatprep.subr.mxu0 0.0
    %447 = vmatpush1.xpose.msra.mxu0 0.0
    %448 = vmatprep.subr.mxu0 0.0
    %449 = vmatpush1.xpose.msra.mxu0 0.0
    %450 = vmatprep.subr.mxu0 0.0
    %451 = vmatpush1.xpose.msra.mxu0 0.0
    %452 = vmatprep.subr.mxu0 0.0
    %453 = vmatpush1.xpose.msra.mxu0 0.0
    %454 = vmatprep.subr.mxu0 0.0
    %455 = vmatpush1.xpose.msra.mxu0 0.0
    %456 = vmatprep.subr.mxu0 0.0
    %457 = vmatpush1.xpose.msra.mxu0 0.0
    %458 = vmatprep.subr.mxu0 0.0
    %459 = vmatpush1.xpose.msra.mxu0 0.0
    %460 = vmatprep.subr.mxu0 0.0
    %461 = vmatpush1.xpose.msra.mxu0 0.0
    %462 = vmatprep.subr.mxu0 0.0
    %463 = vmatpush1.xpose.msra.mxu0 0.0
    %464 = vmatprep.subr.mxu0 0.0
    %465 = vmatpush1.xpose.msra.mxu0 0.0
    %466 = vmatprep.subr.mxu0 0.0
    %467 = vmatpush1.xpose.msra.mxu0 0.0
    %468 = vmatprep.subr.mxu0 0.0
    %469 = vmatpush1.xpose.msra.mxu0 0.0
    %470 = vmatprep.subr.mxu0 0.0
    %471 = vmatpush1.xpose.msra.mxu0 0.0
    %472 = vmatprep.subr.mxu0 0.0
    %473 = vmatpush1.xpose.msra.mxu0 0.0
    %474 = vmatprep.subr.mxu0 0.0
    %475 = vmatpush1.xpose.msra.mxu0 0.0
    %476 = vmatprep.subr.mxu0 0.0
    %477 = vmatpush1.xpose.msra.mxu0 0.0
    %478 = vmatprep.mubr.f32.mxu0 0.0
    %479 = vmatmul.mubr.f32.gmra.mrb[0].mxu0 %v385
    %v480 = vpop.f32.mrb[0].mxu0
    %v481 = vadd.f32 0.0, %v480
    %v482 = vpop.f32.mrb[0].mxu0
    %483 = vmatprep.mubr.f32.mxu0 0.0
    %484 = vmatmul.mubr.f32.gmra.mrb[0].mxu0 %v388
    %v485 = vpop.f32.mrb[0].mxu0
    %v486 = vadd.f32 0.0, %v485
    %v487 = vpop.f32.mrb[0].mxu0
    %488 = vdwg.mxu0
    %v489 = vlaneseq
    %v490 = vshrl.u32 %v489, 7
    %v491 = vsub.s32 1, %v490
    %v492 = vrot.slane %v23, %v491
    %v493 = vsub.f32 %v492, %v481
    %v494 = vsub.f32 %v492, %v486
    %v495 = vsel %vm144, %v493, inf
    %496 = vmin.xlane.f32.xlu0 %v495
    %v497 = vpop.xlane.xlu0 %496
    %v498 = vsel %vm144, %v494, inf
    %499 = vmin.xlane.f32.xlu0 %v498
    %v500 = vpop.xlane.xlu0 %499
    %vm501 = vcmp.le.f32.partialorder %v493, %v497
    %vm502 = vcmp.le.f32.partialorder %v494, %v500
    %v503 = vsel %vm501, %v152, 64
    %v504 = vsel %vm502, %v152, 64
    %v505 = vsel %vm144, %v503, 2147483647
    %v506 = vand.u32 %v505, 65535
    %v507 = vshra.s32 %v505, 16
    %v508 = vcvt.s32.f32 %v506
    %v509 = vcvt.s32.f32 %v507
    %510 = vmin.xlane.f32.xlu0 %v509
    %v511 = vpop.xlane.xlu0 %510
    %vm512 = vcmp.eq.f32.partialorder %v509, %v511
    %v513 = vsel %vm512, %v508, inf
    %514 = vmin.xlane.f32.xlu0 %v513
    %v515 = vpop.xlane.xlu0 %514
    %v516 = vcvt.f32.s32 %v515
    %v517 = vcvt.f32.s32 %v511
    %v518 = vshll.u32 %v517, 16
    %v519 = vadd.s32 %v518, %v516
    %v520 = vsel %vm144, %v504, 2147483647
    %v521 = vand.u32 %v520, 65535
    %v522 = vshra.s32 %v520, 16
    %v523 = vcvt.s32.f32 %v521
    %v524 = vcvt.s32.f32 %v522
    %525 = vmin.xlane.f32.xlu0 %v524
    %v526 = vpop.xlane.xlu0 %525
    %vm527 = vcmp.eq.f32.partialorder %v524, %v526
    %v528 = vsel %vm527, %v523, inf
    %529 = vmin.xlane.f32.xlu0 %v528
    %v530 = vpop.xlane.xlu0 %529
    %v531 = vcvt.f32.s32 %v530
    %v532 = vcvt.f32.s32 %v526
    %v533 = vshll.u32 %v532, 16
    %v534 = vadd.s32 %v533, %v531
    %vm535 = vcmp.eq.s32.totalorder %v152, %v519
    %vm536 = vcmp.eq.s32.totalorder %v152, %v534
    %v537 = vsel %vm535, 1, 0
    %v538 = vsel %vm536, 1, 0
    %v539 = vcvt.s32.f32 %v537
    %v540 = vcvt.s32.f32 %v538
    %v542 = vsel %vm144, %v539, 0
    %v545 = vsel %vm144, %v540, 0
    %547 = vmatprep.subr.mxu0 0.0
    %548 = vmatpush1.msra.mxu0 %v376
    %549 = vmatprep.subr.mxu0 0.0
    %550 = vmatpush1.msra.mxu0 %v377
    %551 = vmatprep.subr.mxu0 0.0
    %552 = vmatpush1.msra.mxu0 %v378
    %553 = vmatprep.subr.mxu0 0.0
    %554 = vmatpush1.msra.mxu0 %v379
    %555 = vmatprep.subr.mxu0 0.0
    %556 = vmatpush1.msra.mxu0 %v380
    %557 = vmatprep.subr.mxu0 0.0
    %558 = vmatpush1.msra.mxu0 %v381
    %559 = vmatprep.subr.mxu0 0.0
    %560 = vmatpush1.msra.mxu0 %v382
    %561 = vmatprep.subr.mxu0 0.0
    %562 = vmatpush1.msra.mxu0 %v383
    %563 = vmatprep.subr.mxu0 0.0
    %564 = vmatpush1.msra.mxu0 0.0
    %565 = vmatprep.subr.mxu0 0.0
    %566 = vmatpush1.msra.mxu0 0.0
    %567 = vmatprep.subr.mxu0 0.0
    %568 = vmatpush1.msra.mxu0 0.0
    %569 = vmatprep.subr.mxu0 0.0
    %570 = vmatpush1.msra.mxu0 0.0
    %571 = vmatprep.subr.mxu0 0.0
    %572 = vmatpush1.msra.mxu0 0.0
    %573 = vmatprep.subr.mxu0 0.0
    %574 = vmatpush1.msra.mxu0 0.0
    %575 = vmatprep.subr.mxu0 0.0
    %576 = vmatpush1.msra.mxu0 0.0
    %577 = vmatprep.subr.mxu0 0.0
    %578 = vmatpush1.msra.mxu0 0.0
    %579 = vmatprep.subr.mxu0 0.0
    %580 = vmatpush1.msra.mxu0 0.0
    %581 = vmatprep.subr.mxu0 0.0
    %582 = vmatpush1.msra.mxu0 0.0
    %583 = vmatprep.subr.mxu0 0.0
    %584 = vmatpush1.msra.mxu0 0.0
    %585 = vmatprep.subr.mxu0 0.0
    %586 = vmatpush1.msra.mxu0 0.0
    %587 = vmatprep.subr.mxu0 0.0
    %588 = vmatpush1.msra.mxu0 0.0
    %589 = vmatprep.subr.mxu0 0.0
    %590 = vmatpush1.msra.mxu0 0.0
    %591 = vmatprep.subr.mxu0 0.0
    %592 = vmatpush1.msra.mxu0 0.0
    %593 = vmatprep.subr.mxu0 0.0
    %594 = vmatpush1.msra.mxu0 0.0
    %595 = vmatprep.subr.mxu0 0.0
    %596 = vmatpush1.msra.mxu0 0.0
    %597 = vmatprep.subr.mxu0 0.0
    %598 = vmatpush1.msra.mxu0 0.0
    %599 = vmatprep.subr.mxu0 0.0
    %600 = vmatpush1.msra.mxu0 0.0
    %601 = vmatprep.subr.mxu0 0.0
    %602 = vmatpush1.msra.mxu0 0.0
    %603 = vmatprep.subr.mxu0 0.0
    %604 = vmatpush1.msra.mxu0 0.0
    %605 = vmatprep.subr.mxu0 0.0
    %606 = vmatpush1.msra.mxu0 0.0
    %607 = vmatprep.subr.mxu0 0.0
    %608 = vmatpush1.msra.mxu0 0.0
    %609 = vmatprep.subr.mxu0 0.0
    %610 = vmatpush1.msra.mxu0 0.0
    %611 = vmatprep.mubr.f32.mxu0 0.0
    %612 = vmatmul.mubr.f32.gmra.mrb[0].mxu0 %v542
    %v613 = vpop.f32.mrb[0].mxu0
    %v614 = vadd.f32 0.0, %v613
    %v615 = vpop.f32.mrb[0].mxu0
    %616 = vmatprep.mubr.f32.mxu0 0.0
    %617 = vmatmul.mubr.f32.gmra.mrb[0].mxu0 %v545
    %v618 = vpop.f32.mrb[0].mxu0
    %v619 = vadd.f32 0.0, %v618
    %v620 = vpop.f32.mrb[0].mxu0
    %621 = vdwg.mxu0
    %v622 = vsub.f32 %v274, %v614
    %v623 = vsub.f32 %v275, %v619
    %v624 = vmul.f32 %v622, %v622
    %v625 = vmul.f32 %v623, %v623
    %v626 = vsel %vm32, %v624, 0.0
    %627 = vadd.xlane.f32.xlu0 %v626
    %v628 = vpop.xlane.xlu0 %627
    %v629 = vsel %vm32, %v625, 0.0
    %630 = vadd.xlane.f32.xlu0 %v629
    %v631 = vpop.xlane.xlu0 %630
    %v632 = vadd.f32 %v284, %v628
    %v633 = vadd.f32 %v285, %v631
    %v634 = vlaneseq
    %v635 = vshrl.u32 %v634, 7
    %v636 = vsub.s32 %v152, %v635
    %v637 = vrot.slane %v519, %v636
    %v638 = vlaneseq
    %v639 = vshrl.u32 %v638, 7
    %v640 = vsub.s32 %v290, %v639
    %v641 = vrot.slane %v534, %v640
    %v642 = vsel %vm295, %v641, %v637
    %643 = vst.msk [vmem:[#allocation4 + $0x1] sm:$0x1] %vm297, %v642
    %644 = vmatprep.subr.mxu0 0.0
    %645 = vmatpush1.msra.mxu0 %v539
    %646 = vmatprep.subr.mxu0 0.0
    %647 = vmatpush1.msra.mxu0 %v540
    %648 = vmatprep.subr.mxu0 0.0
    %649 = vmatpush1.msra.mxu0 0.0
    %650 = vmatprep.subr.mxu0 0.0
    %651 = vmatpush1.msra.mxu0 0.0
    %652 = vmatprep.subr.mxu0 0.0
    %653 = vmatpush1.msra.mxu0 0.0
    %654 = vmatprep.subr.mxu0 0.0
    %655 = vmatpush1.msra.mxu0 0.0
    %656 = vmatprep.subr.mxu0 0.0
    %657 = vmatpush1.msra.mxu0 0.0
    %658 = vmatprep.subr.mxu0 0.0
    %659 = vmatpush1.msra.mxu0 0.0
    %660 = vmatprep.subr.mxu0 0.0
    %661 = vmatpush1.msra.mxu0 0.0
    %662 = vmatprep.subr.mxu0 0.0
    %663 = vmatpush1.msra.mxu0 0.0
    %664 = vmatprep.subr.mxu0 0.0
    %665 = vmatpush1.msra.mxu0 0.0
    %666 = vmatprep.subr.mxu0 0.0
    %667 = vmatpush1.msra.mxu0 0.0
    %668 = vmatprep.subr.mxu0 0.0
    %669 = vmatpush1.msra.mxu0 0.0
    %670 = vmatprep.subr.mxu0 0.0
    %671 = vmatpush1.msra.mxu0 0.0
    %672 = vmatprep.subr.mxu0 0.0
    %673 = vmatpush1.msra.mxu0 0.0
    %674 = vmatprep.subr.mxu0 0.0
    %675 = vmatpush1.msra.mxu0 0.0
    %676 = vmatprep.subr.mxu0 0.0
    %677 = vmatpush1.msra.mxu0 0.0
    %678 = vmatprep.subr.mxu0 0.0
    %679 = vmatpush1.msra.mxu0 0.0
    %680 = vmatprep.subr.mxu0 0.0
    %681 = vmatpush1.msra.mxu0 0.0
    %682 = vmatprep.subr.mxu0 0.0
    %683 = vmatpush1.msra.mxu0 0.0
    %684 = vmatprep.subr.mxu0 0.0
    %685 = vmatpush1.msra.mxu0 0.0
    %686 = vmatprep.subr.mxu0 0.0
    %687 = vmatpush1.msra.mxu0 0.0
    %688 = vmatprep.subr.mxu0 0.0
    %689 = vmatpush1.msra.mxu0 0.0
    %690 = vmatprep.subr.mxu0 0.0
    %691 = vmatpush1.msra.mxu0 0.0
    %692 = vmatprep.subr.mxu0 0.0
    %693 = vmatpush1.msra.mxu0 0.0
    %694 = vmatprep.subr.mxu0 0.0
    %695 = vmatpush1.msra.mxu0 0.0
    %696 = vmatprep.subr.mxu0 0.0
    %697 = vmatpush1.msra.mxu0 0.0
    %698 = vmatprep.subr.mxu0 0.0
    %699 = vmatpush1.msra.mxu0 0.0
    %700 = vmatprep.subr.mxu0 0.0
    %701 = vmatpush1.msra.mxu0 0.0
    %702 = vmatprep.subr.mxu0 0.0
    %703 = vmatpush1.msra.mxu0 0.0
    %704 = vmatprep.subr.mxu0 0.0
    %705 = vmatpush1.msra.mxu0 0.0
    %706 = vmatprep.subr.mxu0 0.0
    %707 = vmatpush1.msra.mxu0 0.0
    %708 = vmatprep.mubr.f32.mxu0 0.0
    %709 = vmatmul.mubr.f32.gmra.mrb[0].mxu0 %v301
    %v710 = vpop.f32.mrb[0].mxu0
    %v711 = vadd.f32 0.0, %v710
    %v712 = vpop.f32.mrb[0].mxu0
    %713 = vdwg.mxu0
    %714 = vst.msk [vmem:[#allocation7 + $0x1] sm:$0x1] %vm373, %v711
    %v715 = vsub.f32 %v21, %v622
    %v716 = vsub.f32 %v22, %v623
    %717 = vst.msk [vmem:[#allocation2] sm:$0xff] %vm32, %v715
    %718 = vst.msk [vmem:[#allocation2 + $0x8] sm:$0xff] %vm32, %v716
    %719 = vmatprep.subr.mxu0 0.0
    %720 = vmatpush1.msra.mxu0 %v632
    %721 = vmatprep.subr.mxu0 0.0
    %722 = vmatpush1.msra.mxu0 %v633
    %723 = vmatprep.subr.mxu0 0.0
    %724 = vmatpush1.msra.mxu0 0.0
    %725 = vmatprep.subr.mxu0 0.0
    %726 = vmatpush1.msra.mxu0 0.0
    %727 = vmatprep.subr.mxu0 0.0
    %728 = vmatpush1.msra.mxu0 0.0
    %729 = vmatprep.subr.mxu0 0.0
    %730 = vmatpush1.msra.mxu0 0.0
    %731 = vmatprep.subr.mxu0 0.0
    %732 = vmatpush1.msra.mxu0 0.0
    %733 = vmatprep.subr.mxu0 0.0
    %734 = vmatpush1.msra.mxu0 0.0
    %735 = vmatprep.subr.mxu0 0.0
    %736 = vmatpush1.msra.mxu0 0.0
    %737 = vmatprep.subr.mxu0 0.0
    %738 = vmatpush1.msra.mxu0 0.0
    %739 = vmatprep.subr.mxu0 0.0
    %740 = vmatpush1.msra.mxu0 0.0
    %741 = vmatprep.subr.mxu0 0.0
    %742 = vmatpush1.msra.mxu0 0.0
    %743 = vmatprep.subr.mxu0 0.0
    %744 = vmatpush1.msra.mxu0 0.0
    %745 = vmatprep.subr.mxu0 0.0
    %746 = vmatpush1.msra.mxu0 0.0
    %747 = vmatprep.subr.mxu0 0.0
    %748 = vmatpush1.msra.mxu0 0.0
    %749 = vmatprep.subr.mxu0 0.0
    %750 = vmatpush1.msra.mxu0 0.0
    %751 = vmatprep.subr.mxu0 0.0
    %752 = vmatpush1.msra.mxu0 0.0
    %753 = vmatprep.subr.mxu0 0.0
    %754 = vmatpush1.msra.mxu0 0.0
    %755 = vmatprep.subr.mxu0 0.0
    %756 = vmatpush1.msra.mxu0 0.0
    %757 = vmatprep.subr.mxu0 0.0
    %758 = vmatpush1.msra.mxu0 0.0
    %759 = vmatprep.subr.mxu0 0.0
    %760 = vmatpush1.msra.mxu0 0.0
    %761 = vmatprep.subr.mxu0 0.0
    %762 = vmatpush1.msra.mxu0 0.0
    %763 = vmatprep.subr.mxu0 0.0
    %764 = vmatpush1.msra.mxu0 0.0
    %765 = vmatprep.subr.mxu0 0.0
    %766 = vmatpush1.msra.mxu0 0.0
    %767 = vmatprep.subr.mxu0 0.0
    %768 = vmatpush1.msra.mxu0 0.0
    %769 = vmatprep.subr.mxu0 0.0
    %770 = vmatpush1.msra.mxu0 0.0
    %771 = vmatprep.subr.mxu0 0.0
    %772 = vmatpush1.msra.mxu0 0.0
    %773 = vmatprep.subr.mxu0 0.0
    %774 = vmatpush1.msra.mxu0 0.0
    %775 = vmatprep.subr.mxu0 0.0
    %776 = vmatpush1.msra.mxu0 0.0
    %777 = vmatprep.subr.mxu0 0.0
    %778 = vmatpush1.msra.mxu0 0.0
    %779 = vmatprep.subr.mxu0 0.0
    %780 = vmatpush1.msra.mxu0 0.0
    %781 = vmatprep.subr.mxu0 0.0
    %782 = vmatpush1.msra.mxu0 0.0
    %783 = vmatprep.mubr.f32.mxu0 0.0
    %784 = vmatmul.mubr.f32.gmra.mrb[0].mxu0 %v301
    %v785 = vpop.f32.mrb[0].mxu0
    %v786 = vadd.f32 0.0, %v785
    %v787 = vpop.f32.mrb[0].mxu0
    %788 = vdwg.mxu0
    %790 = vset.pattern.permute.xlu0 0
    %791 = vperm.xlu0 %790, %v786
    %v792 = vpop.permute.xlu0 %791
    %794 = vst [vmem:[#allocation6] sm:$0x1] %v792
    // Predicated region
    $region14: #{tpu_custom_call.1} parent=1 // pred_check
      _
    $region15: #{tpu_custom_call.1} parent=1 // pred_check_branch
      %796 = sbr.rel (0) target = $region17
    $region16: #{tpu_custom_call.1} parent=1 // pred_region
      %s798 = ssub.s32 256, 256
      %799 = vsyncadd [#allocation3], %s798
      %s800 = sshll.u32 [#allocation2], 4
      %s801 = int_to_ptr.vmem [resolvable:$true] %s800
      %806 = dma.vmem_to_hbm [thread:$0]  %s801, 256, %s3, [#allocation3], 128, 128, 8
    $region17: #{tpu_custom_call.1} parent=1 // pred_fallthru
      _
    // Predicated region
    $region18: #{tpu_custom_call.1} parent=1 // pred_check
      _
    $region19: #{tpu_custom_call.1} parent=1 // pred_check_branch
      %808 = sbr.rel (0) target = $region21
    $region20: #{tpu_custom_call.1} parent=1 // pred_region
      %s810 = ssub.s32 32, 32
      %811 = vsyncadd [#allocation5], %s810
      %s813 = sshll.u32 [#allocation4], 4
      %s814 = int_to_ptr.vmem [resolvable:$true] %s813
      %816 = dma.vmem_to_hbm [thread:$0]  %s814, 32, %s4, [#allocation5]
    $region21: #{tpu_custom_call.1} parent=1 // pred_fallthru
      _
    // Predicated region
    $region22: #{tpu_custom_call.1} parent=1 // pred_check
      _
    $region23: #{tpu_custom_call.1} parent=1 // pred_check_branch
      %818 = sbr.rel (0) target = $region25
    $region24: #{tpu_custom_call.1} parent=1 // pred_region
      %s820 = ssub.s32 16, 16
      %821 = vsyncadd [#allocation5], %s820
      %s823 = sshll.u32 [#allocation6], 4
      %s824 = int_to_ptr.vmem [resolvable:$true] %s823
      %826 = dma.vmem_to_hbm [thread:$0]  %s824, 16, %s5, [#allocation5]
    $region25: #{tpu_custom_call.1} parent=1 // pred_fallthru
      _
    // Predicated region
    $region26: #{tpu_custom_call.1} parent=1 // pred_check
      _
    $region27: #{tpu_custom_call.1} parent=1 // pred_check_branch
      %828 = sbr.rel (0) target = $region29
    $region28: #{tpu_custom_call.1} parent=1 // pred_region
      %s830 = ssub.s32 32, 32
      %831 = vsyncadd [#allocation8], %s830
      %s833 = sshll.u32 [#allocation7], 4
      %s834 = int_to_ptr.vmem [resolvable:$true] %s833
      %836 = dma.vmem_to_hbm [thread:$0]  %s834, 32, %s6, [#allocation8]
    $region29: #{tpu_custom_call.1} parent=1 // pred_fallthru
      _
    // Predicated region
    $region30: #{tpu_custom_call.1} parent=1 // pred_check
      _
    $region31: #{tpu_custom_call.1} parent=1 // pred_check_branch
      %838 = sbr.rel (0) target = $region33
    $region32: #{tpu_custom_call.1} parent=1 // pred_region
      %839 = dma.done [#allocation3], 256
    $region33: #{tpu_custom_call.1} parent=1 // pred_fallthru
      _
    // Predicated region
    $region34: #{tpu_custom_call.1} parent=1 // pred_check
      _
    $region35: #{tpu_custom_call.1} parent=1 // pred_check_branch
      %841 = sbr.rel (0) target = $region37
    $region36: #{tpu_custom_call.1} parent=1 // pred_region
      %842 = dma.done [#allocation5], 32
    $region37: #{tpu_custom_call.1} parent=1 // pred_fallthru
      _
    // Predicated region
    $region38: #{tpu_custom_call.1} parent=1 // pred_check
      _
    $region39: #{tpu_custom_call.1} parent=1 // pred_check_branch
      %844 = sbr.rel (0) target = $region41
    $region40: #{tpu_custom_call.1} parent=1 // pred_region
      %845 = dma.done [#allocation5], 16
    $region41: #{tpu_custom_call.1} parent=1 // pred_fallthru
      _
    // Predicated region
    $region42: #{tpu_custom_call.1} parent=1 // pred_check
      _
    $region43: #{tpu_custom_call.1} parent=1 // pred_check_branch
      %847 = sbr.rel (0) target = $region45
    $region44: #{tpu_custom_call.1} parent=1 // pred_region
      %848 = dma.done [#allocation8], 32
    $region45: #{tpu_custom_call.1} parent=1 // pred_fallthru
      _
    %849 = vsyncpa [#allocation3], 1
    %850 = vsyncpa [#allocation5], 1
    %851 = vsyncpa [#allocation8], 1

// kernel: tpu_custom_call.1
$region0: #{tpu_custom_call.1}
  #allocation0 [shape = 'u32[]', space=smem, size = 0x4, offset = 0x4, fixed_abs, tag = 'smem constant byte address 0x4 - core index']
  #allocation1 [shape = 'u32[144,128]{1,0:T(1,128)}', space=vmem, size = 0x12000, scoped, tag = 'internal scratch']
  %s0 = inlined_call_operand.vmem [shape: f32[16,32], index: 0, kind: input, shape index: {}]
  %s1 = inlined_call_operand.vmem [shape: f32[2,64,32], index: 1, kind: input, shape index: {}]
  %s2 = inlined_call_operand.vmem [shape: f32[2,64], index: 2, kind: input, shape index: {}]
  %s3 = inlined_call_operand.hbm [shape: f32[16,32], index: 3, kind: output, shape index: {0}]
  %s4 = inlined_call_operand.hbm [shape: s32[2,16], index: 4, kind: output, shape index: {1}]
  %s5 = inlined_call_operand.hbm [shape: f32[1,1,128], index: 5, kind: output, shape index: {2}]
  %s6 = inlined_call_operand.hbm [shape: f32[1,2,64], index: 6, kind: output, shape index: {3}]
  %7 = xla_tuple %s3, %s4, %s5, %s6
  %s8 = sld [smem:[#allocation0]]
  $region46: #{tpu_custom_call.1} parent=0
    _
  %s10 = ssub.s32 1, %s8
  %s11 = scalar_select 0, %s10, %s8
  $region1: #{tpu_custom_call.1} parent=0
    #allocation2 [shape = 'u8[8192]{0}', space=vmem, size = 0x2000, scoped, tag = 'output window, operand 0, single buffered']
    #allocation3 [shape = 's32[1]{0}', space=sflag, size = 0x4, scoped, tag = 'scoped memory for tpu_custom_call.1']
    #allocation4 [shape = 'u8[1024]{0}', space=vmem, size = 0x400, scoped, tag = 'output window, operand 1, single buffered']
    #allocation5 [shape = 's32[1]{0}', space=sflag, size = 0x4, scoped, tag = 'scoped memory for tpu_custom_call.1']
    #allocation6 [shape = 'u8[512]{0}', space=vmem, size = 0x400, scoped, tag = 'output window, operand 2, single buffered']
    #allocation7 [shape = 'u8[1024]{0}', space=vmem, size = 0x400, scoped, tag = 'output window, operand 3, single buffered']
    #allocation8 [shape = 's32[1]{0}', space=sflag, size = 0x4, scoped, tag = 'scoped memory for tpu_custom_call.1']
    %12 = vsyncpa [#allocation3], 0
    %13 = vsyncpa [#allocation5], 0
    %14 = vsyncpa [#allocation8], 0
    // Predicated region
    $region2: #{tpu_custom_call.1} parent=1 // pred_check
      _
    $region3: #{tpu_custom_call.1} parent=1 // pred_check_branch
      %16 = sbr.rel (0) target = $region5
    $region4: #{tpu_custom_call.1} parent=1 // pred_region
      _
    $region5: #{tpu_custom_call.1} parent=1 // pred_fallthru
      _
    // Predicated region
    $region6: #{tpu_custom_call.1} parent=1 // pred_check
      _
    $region7: #{tpu_custom_call.1} parent=1 // pred_check_branch
      %18 = sbr.rel (0) target = $region9
    $region8: #{tpu_custom_call.1} parent=1 // pred_region
      _
    $region9: #{tpu_custom_call.1} parent=1 // pred_fallthru
      _
    // Predicated region
    $region10: #{tpu_custom_call.1} parent=1 // pred_check
      _
    $region11: #{tpu_custom_call.1} parent=1 // pred_check_branch
      %20 = sbr.rel (0) target = $region13
    $region12: #{tpu_custom_call.1} parent=1 // pred_region
      _
    $region13: #{tpu_custom_call.1} parent=1 // pred_fallthru
      _
    %v21 = vld [vmem:[%s0] sm:$0xff]
    %v22 = vld [vmem:[%s0 + $0x8] sm:$0xff]
    %v23 = vld [vmem:[%s2] sm:$0x3]
    %v24 = vld [vmem:[%s1] sm:$0xff]
    %v25 = vld [vmem:[%s1 + $0x8] sm:$0xff]
    %v26 = vld [vmem:[%s1 + $0x10] sm:$0xff]
    %v27 = vld [vmem:[%s1 + $0x18] sm:$0xff]
    %v28 = vld [vmem:[%s1 + $0x20] sm:$0xff]
    %v29 = vld [vmem:[%s1 + $0x28] sm:$0xff]
    %v30 = vld [vmem:[%s1 + $0x30] sm:$0xff]
    %v31 = vld [vmem:[%s1 + $0x38] sm:$0xff]
    %vm32 = vcmask 261120
    %v34 = vsel %vm32, %v21, 0
    %v37 = vsel %vm32, %v22, 0
    %v40 = vsel %vm32, %v24, 0
    %v43 = vsel %vm32, %v25, 0
    %v46 = vsel %vm32, %v26, 0
    %v49 = vsel %vm32, %v27, 0
    %v52 = vsel %vm32, %v28, 0
    %v55 = vsel %vm32, %v29, 0
    %v58 = vsel %vm32, %v30, 0
    %v61 = vsel %vm32, %v31, 0
    %63 = vmatprep.subr.mxu0 0.0
    %64 = vmatpush1.xpose.msra.mxu0 %v40
    %65 = vmatprep.subr.mxu0 0.0
    %66 = vmatpush1.xpose.msra.mxu0 %v43
    %67 = vmatprep.subr.mxu0 0.0
    %68 = vmatpush1.xpose.msra.mxu0 %v46
    %69 = vmatprep.subr.mxu0 0.0
    %70 = vmatpush1.xpose.msra.mxu0 %v49
    %71 = vmatprep.subr.mxu0 0.0
    %72 = vmatpush1.xpose.msra.mxu0 %v52
    %73 = vmatprep.subr.mxu0 0.0
    %74 = vmatpush1.xpose.msra.mxu0 %v55
    %75 = vmatprep.subr.mxu0 0.0
    %76 = vmatpush1.xpose.msra.mxu0 %v58
    %77 = vmatprep.subr.mxu0 0.0
    %78 = vmatpush1.xpose.msra.mxu0 %v61
    %79 = vmatprep.subr.mxu0 0.0
    %80 = vmatpush1.xpose.msra.mxu0 0.0
    %81 = vmatprep.subr.mxu0 0.0
    %82 = vmatpush1.xpose.msra.mxu0 0.0
    %83 = vmatprep.subr.mxu0 0.0
    %84 = vmatpush1.xpose.msra.mxu0 0.0
    %85 = vmatprep.subr.mxu0 0.0
    %86 = vmatpush1.xpose.msra.mxu0 0.0
    %87 = vmatprep.subr.mxu0 0.0
    %88 = vmatpush1.xpose.msra.mxu0 0.0
    %89 = vmatprep.subr.mxu0 0.0
    %90 = vmatpush1.xpose.msra.mxu0 0.0
    %91 = vmatprep.subr.mxu0 0.0
    %92 = vmatpush1.xpose.msra.mxu0 0.0
    %93 = vmatprep.subr.mxu0 0.0
    %94 = vmatpush1.xpose.msra.mxu0 0.0
    %95 = vmatprep.subr.mxu0 0.0
    %96 = vmatpush1.xpose.msra.mxu0 0.0
    %97 = vmatprep.subr.mxu0 0.0
    %98 = vmatpush1.xpose.msra.mxu0 0.0
    %99 = vmatprep.subr.mxu0 0.0
    %100 = vmatpush1.xpose.msra.mxu0 0.0
    %101 = vmatprep.subr.mxu0 0.0
    %102 = vmatpush1.xpose.msra.mxu0 0.0
    %103 = vmatprep.subr.mxu0 0.0
    %104 = vmatpush1.xpose.msra.mxu0 0.0
    %105 = vmatprep.subr.mxu0 0.0
    %106 = vmatpush1.xpose.msra.mxu0 0.0
    %107 = vmatprep.subr.mxu0 0.0
    %108 = vmatpush1.xpose.msra.mxu0 0.0
    %109 = vmatprep.subr.mxu0 0.0
    %110 = vmatpush1.xpose.msra.mxu0 0.0
    %111 = vmatprep.subr.mxu0 0.0
    %112 = vmatpush1.xpose.msra.mxu0 0.0
    %113 = vmatprep.subr.mxu0 0.0
    %114 = vmatpush1.xpose.msra.mxu0 0.0
    %115 = vmatprep.subr.mxu0 0.0
    %116 = vmatpush1.xpose.msra.mxu0 0.0
    %117 = vmatprep.subr.mxu0 0.0
    %118 = vmatpush1.xpose.msra.mxu0 0.0
    %119 = vmatprep.subr.mxu0 0.0
    %120 = vmatpush1.xpose.msra.mxu0 0.0
    %121 = vmatprep.subr.mxu0 0.0
    %122 = vmatpush1.xpose.msra.mxu0 0.0
    %123 = vmatprep.subr.mxu0 0.0
    %124 = vmatpush1.xpose.msra.mxu0 0.0
    %125 = vmatprep.subr.mxu0 0.0
    %126 = vmatpush1.xpose.msra.mxu0 0.0
    %127 = vmatprep.mubr.f32.mxu0 0.0
    %128 = vmatmul.mubr.f32.gmra.mrb[0].mxu0 %v34
    %v129 = vpop.f32.mrb[0].mxu0
    %v130 = vadd.f32 0.0, %v129
    %v131 = vpop.f32.mrb[0].mxu0
    %132 = vmatprep.mubr.f32.mxu0 0.0
    %133 = vmatmul.mubr.f32.gmra.mrb[0].mxu0 %v37
    %v134 = vpop.f32.mrb[0].mxu0
    %v135 = vadd.f32 0.0, %v134
    %v136 = vpop.f32.mrb[0].mxu0
    %137 = vdwg.mxu0
    %v138 = vlaneseq
    %v139 = vshrl.u32 %v138, 7
    %v140 = vsub.s32 0, %v139
    %v141 = vrot.slane %v23, %v140
    %v142 = vsub.f32 %v141, %v130
    %v143 = vsub.f32 %v141, %v135
    %vm144 = vcmask 523264
    %v145 = vsel %vm144, %v142, inf
    %146 = vmin.xlane.f32.xlu0 %v145
    %v147 = vpop.xlane.xlu0 %146
    %v148 = vsel %vm144, %v143, inf
    %149 = vmin.xlane.f32.xlu0 %v148
    %v150 = vpop.xlane.xlu0 %149
    %v151 = vlaneseq
    %v152 = vand.u32 %v151, 127
    %vm153 = vcmp.le.f32.partialorder %v142, %v147
    %vm154 = vcmp.le.f32.partialorder %v143, %v150
    %v155 = vsel %vm153, %v152, 64
    %v156 = vsel %vm154, %v152, 64
    %v157 = vsel %vm144, %v155, 2147483647
    %v158 = vand.u32 %v157, 65535
    %v159 = vshra.s32 %v157, 16
    %v160 = vcvt.s32.f32 %v158
    %v161 = vcvt.s32.f32 %v159
    %162 = vmin.xlane.f32.xlu0 %v161
    %v163 = vpop.xlane.xlu0 %162
    %vm164 = vcmp.eq.f32.partialorder %v161, %v163
    %v165 = vsel %vm164, %v160, inf
    %166 = vmin.xlane.f32.xlu0 %v165
    %v167 = vpop.xlane.xlu0 %166
    %v168 = vcvt.f32.s32 %v167
    %v169 = vcvt.f32.s32 %v163
    %v170 = vshll.u32 %v169, 16
    %v171 = vadd.s32 %v170, %v168
    %v172 = vsel %vm144, %v156, 2147483647
    %v173 = vand.u32 %v172, 65535
    %v174 = vshra.s32 %v172, 16
    %v175 = vcvt.s32.f32 %v173
    %v176 = vcvt.s32.f32 %v174
    %177 = vmin.xlane.f32.xlu0 %v176
    %v178 = vpop.xlane.xlu0 %177
    %vm179 = vcmp.eq.f32.partialorder %v176, %v178
    %v180 = vsel %vm179, %v175, inf
    %181 = vmin.xlane.f32.xlu0 %v180
    %v182 = vpop.xlane.xlu0 %181
    %v183 = vcvt.f32.s32 %v182
    %v184 = vcvt.f32.s32 %v178
    %v185 = vshll.u32 %v184, 16
    %v186 = vadd.s32 %v185, %v183
    %vm187 = vcmp.eq.s32.totalorder %v152, %v171
    %vm188 = vcmp.eq.s32.totalorder %v152, %v186
    %v189 = vsel %vm187, 1, 0
    %v190 = vsel %vm188, 1, 0
    %v191 = vcvt.s32.f32 %v189
    %v192 = vcvt.s32.f32 %v190
    %v194 = vsel %vm144, %v191, 0
    %v197 = vsel %vm144, %v192, 0
    %199 = vmatprep.subr.mxu0 0.0
    %200 = vmatpush1.msra.mxu0 %v24
    %201 = vmatprep.subr.mxu0 0.0
    %202 = vmatpush1.msra.mxu0 %v25
    %203 = vmatprep.subr.mxu0 0.0
    %204 = vmatpush1.msra.mxu0 %v26
    %205 = vmatprep.subr.mxu0 0.0
    %206 = vmatpush1.msra.mxu0 %v27
    %207 = vmatprep.subr.mxu0 0.0
    %208 = vmatpush1.msra.mxu0 %v28
    %209 = vmatprep.subr.mxu0 0.0
    %210 = vmatpush1.msra.mxu0 %v29
    %211 = vmatprep.subr.mxu0 0.0
    %212 = vmatpush1.msra.mxu0 %v30
    %213 = vmatprep.subr.mxu0 0.0
    %214 = vmatpush1.msra.mxu0 %v31
    %215 = vmatprep.subr.mxu0 0.0
    %216 = vmatpush1.msra.mxu0 0.0
    %217 = vmatprep.subr.mxu0 0.0
    %218 = vmatpush1.msra.mxu0 0.0
    %219 = vmatprep.subr.mxu0 0.0
    %220 = vmatpush1.msra.mxu0 0.0
    %221 = vmatprep.subr.mxu0 0.0
    %222 = vmatpush1.msra.mxu0 0.0
    %223 = vmatprep.subr.mxu0 0.0
    %224 = vmatpush1.msra.mxu0 0.0
    %225 = vmatprep.subr.mxu0 0.0
    %226 = vmatpush1.msra.mxu0 0.0
    %227 = vmatprep.subr.mxu0 0.0
    %228 = vmatpush1.msra.mxu0 0.0
    %229 = vmatprep.subr.mxu0 0.0
    %230 = vmatpush1.msra.mxu0 0.0
    %231 = vmatprep.subr.mxu0 0.0
    %232 = vmatpush1.msra.mxu0 0.0
    %233 = vmatprep.subr.mxu0 0.0
    %234 = vmatpush1.msra.mxu0 0.0
    %235 = vmatprep.subr.mxu0 0.0
    %236 = vmatpush1.msra.mxu0 0.0
    %237 = vmatprep.subr.mxu0 0.0
    %238 = vmatpush1.msra.mxu0 0.0
    %239 = vmatprep.subr.mxu0 0.0
    %240 = vmatpush1.msra.mxu0 0.0
    %241 = vmatprep.subr.mxu0 0.0
    %242 = vmatpush1.msra.mxu0 0.0
    %243 = vmatprep.subr.mxu0 0.0
    %244 = vmatpush1.msra.mxu0 0.0
    %245 = vmatprep.subr.mxu0 0.0
    %246 = vmatpush1.msra.mxu0 0.0
    %247 = vmatprep.subr.mxu0 0.0
    %248 = vmatpush1.msra.mxu0 0.0
    %249 = vmatprep.subr.mxu0 0.0
    %250 = vmatpush1.msra.mxu0 0.0
    %251 = vmatprep.subr.mxu0 0.0
    %252 = vmatpush1.msra.mxu0 0.0
    %253 = vmatprep.subr.mxu0 0.0
    %254 = vmatpush1.msra.mxu0 0.0
    %255 = vmatprep.subr.mxu0 0.0
    %256 = vmatpush1.msra.mxu0 0.0
    %257 = vmatprep.subr.mxu0 0.0
    %258 = vmatpush1.msra.mxu0 0.0
    %259 = vmatprep.subr.mxu0 0.0
    %260 = vmatpush1.msra.mxu0 0.0
    %261 = vmatprep.subr.mxu0 0.0
    %262 = vmatpush1.msra.mxu0 0.0
    %263 = vmatprep.mubr.f32.mxu0 0.0
    %264 = vmatmul.mubr.f32.gmra.mrb[0].mxu0 %v194
    %v265 = vpop.f32.mrb[0].mxu0
    %v266 = vadd.f32 0.0, %v265
    %v267 = vpop.f32.mrb[0].mxu0
    %268 = vmatprep.mubr.f32.mxu0 0.0
    %269 = vmatmul.mubr.f32.gmra.mrb[0].mxu0 %v197
    %v270 = vpop.f32.mrb[0].mxu0
    %v271 = vadd.f32 0.0, %v270
    %v272 = vpop.f32.mrb[0].mxu0
    %273 = vdwg.mxu0
    %v274 = vsub.f32 %v21, %v266
    %v275 = vsub.f32 %v22, %v271
    %v276 = vmul.f32 %v274, %v274
    %v277 = vmul.f32 %v275, %v275
    %v278 = vsel %vm32, %v276, 0.0
    %279 = vadd.xlane.f32.xlu0 %v278
    %v280 = vpop.xlane.xlu0 %279
    %v281 = vsel %vm32, %v277, 0.0
    %282 = vadd.xlane.f32.xlu0 %v281
    %v283 = vpop.xlane.xlu0 %282
    %v284 = vadd.f32 %v280, 0.0
    %v285 = vadd.f32 %v283, 0.0
    %v286 = vlaneseq
    %v287 = vshrl.u32 %v286, 7
    %v288 = vsub.s32 %v152, %v287
    %v289 = vrot.slane %v171, %v288
    %v290 = vadd.s32 %v152, 4294967288
    %v291 = vlaneseq
    %v292 = vshrl.u32 %v291, 7
    %v293 = vsub.s32 %v290, %v292
    %v294 = vrot.slane %v186, %v293
    %vm295 = vcmask 130112
    %v296 = vsel %vm295, %v294, %v289
    %vm297 = vcmask 122880
    %298 = vst.msk [vmem:[#allocation4] sm:$0x1] %vm297, %v296
    %vm299 = vcmask 130048
    %v301 = vsel %vm299, 1.0, 0
    %303 = vmatprep.subr.mxu0 0.0
    %304 = vmatpush1.msra.mxu0 %v191
    %305 = vmatprep.subr.mxu0 0.0
    %306 = vmatpush1.msra.mxu0 %v192
    %307 = vmatprep.subr.mxu0 0.0
    %308 = vmatpush1.msra.mxu0 0.0
    %309 = vmatprep.subr.mxu0 0.0
    %310 = vmatpush1.msra.mxu0 0.0
    %311 = vmatprep.subr.mxu0 0.0
    %312 = vmatpush1.msra.mxu0 0.0
    %313 = vmatprep.subr.mxu0 0.0
    %314 = vmatpush1.msra.mxu0 0.0
    %315 = vmatprep.subr.mxu0 0.0
    %316 = vmatpush1.msra.mxu0 0.0
    %317 = vmatprep.subr.mxu0 0.0
    %318 = vmatpush1.msra.mxu0 0.0
    %319 = vmatprep.subr.mxu0 0.0
    %320 = vmatpush1.msra.mxu0 0.0
    %321 = vmatprep.subr.mxu0 0.0
    %322 = vmatpush1.msra.mxu0 0.0
    %323 = vmatprep.subr.mxu0 0.0
    %324 = vmatpush1.msra.mxu0 0.0
    %325 = vmatprep.subr.mxu0 0.0
    %326 = vmatpush1.msra.mxu0 0.0
    %327 = vmatprep.subr.mxu0 0.0
    %328 = vmatpush1.msra.mxu0 0.0
    %329 = vmatprep.subr.mxu0 0.0
    %330 = vmatpush1.msra.mxu0 0.0
    %331 = vmatprep.subr.mxu0 0.0
    %332 = vmatpush1.msra.mxu0 0.0
    %333 = vmatprep.subr.mxu0 0.0
    %334 = vmatpush1.msra.mxu0 0.0
    %335 = vmatprep.subr.mxu0 0.0
    %336 = vmatpush1.msra.mxu0 0.0
    %337 = vmatprep.subr.mxu0 0.0
    %338 = vmatpush1.msra.mxu0 0.0
    %339 = vmatprep.subr.mxu0 0.0
    %340 = vmatpush1.msra.mxu0 0.0
    %341 = vmatprep.subr.mxu0 0.0
    %342 = vmatpush1.msra.mxu0 0.0
    %343 = vmatprep.subr.mxu0 0.0
    %344 = vmatpush1.msra.mxu0 0.0
    %345 = vmatprep.subr.mxu0 0.0
    %346 = vmatpush1.msra.mxu0 0.0
    %347 = vmatprep.subr.mxu0 0.0
    %348 = vmatpush1.msra.mxu0 0.0
    %349 = vmatprep.subr.mxu0 0.0
    %350 = vmatpush1.msra.mxu0 0.0
    %351 = vmatprep.subr.mxu0 0.0
    %352 = vmatpush1.msra.mxu0 0.0
    %353 = vmatprep.subr.mxu0 0.0
    %354 = vmatpush1.msra.mxu0 0.0
    %355 = vmatprep.subr.mxu0 0.0
    %356 = vmatpush1.msra.mxu0 0.0
    %357 = vmatprep.subr.mxu0 0.0
    %358 = vmatpush1.msra.mxu0 0.0
    %359 = vmatprep.subr.mxu0 0.0
    %360 = vmatpush1.msra.mxu0 0.0
    %361 = vmatprep.subr.mxu0 0.0
    %362 = vmatpush1.msra.mxu0 0.0
    %363 = vmatprep.subr.mxu0 0.0
    %364 = vmatpush1.msra.mxu0 0.0
    %365 = vmatprep.subr.mxu0 0.0
    %366 = vmatpush1.msra.mxu0 0.0
    %367 = vmatprep.mubr.f32.mxu0 0.0
    %368 = vmatmul.mubr.f32.gmra.mrb[0].mxu0 %v301
    %v369 = vpop.f32.mrb[0].mxu0
    %v370 = vadd.f32 0.0, %v369
    %v371 = vpop.f32.mrb[0].mxu0
    %372 = vdwg.mxu0
    %vm373 = vcmask 516096
    %374 = vst.msk [vmem:[#allocation7] sm:$0x1] %vm373, %v370
    %s375 = scalar_lea.vmem %s1, 64
    %v376 = vld [vmem:[%s375] sm:$0xff]
    %v377 = vld [vmem:[%s375 + $0x8] sm:$0xff]
    %v378 = vld [vmem:[%s375 + $0x10] sm:$0xff]
    %v379 = vld [vmem:[%s375 + $0x18] sm:$0xff]
    %v380 = vld [vmem:[%s375 + $0x20] sm:$0xff]
    %v381 = vld [vmem:[%s375 + $0x28] sm:$0xff]
    %v382 = vld [vmem:[%s375 + $0x30] sm:$0xff]
    %v383 = vld [vmem:[%s375 + $0x38] sm:$0xff]
    %v385 = vsel %vm32, %v274, 0
    %v388 = vsel %vm32, %v275, 0
    %v391 = vsel %vm32, %v376, 0
    %v394 = vsel %vm32, %v377, 0
    %v397 = vsel %vm32, %v378, 0
    %v400 = vsel %vm32, %v379, 0
    %v403 = vsel %vm32, %v380, 0
    %v406 = vsel %vm32, %v381, 0
    %v409 = vsel %vm32, %v382, 0
    %v412 = vsel %vm32, %v383, 0
    %414 = vmatprep.subr.mxu0 0.0
    %415 = vmatpush1.xpose.msra.mxu0 %v391
    %416 = vmatprep.subr.mxu0 0.0
    %417 = vmatpush1.xpose.msra.mxu0 %v394
    %418 = vmatprep.subr.mxu0 0.0
    %419 = vmatpush1.xpose.msra.mxu0 %v397
    %420 = vmatprep.subr.mxu0 0.0
    %421 = vmatpush1.xpose.msra.mxu0 %v400
    %422 = vmatprep.subr.mxu0 0.0
    %423 = vmatpush1.xpose.msra.mxu0 %v403
    %424 = vmatprep.subr.mxu0 0.0
    %425 = vmatpush1.xpose.msra.mxu0 %v406
    %426 = vmatprep.subr.mxu0 0.0
    %427 = vmatpush1.xpose.msra.mxu0 %v409
    %428 = vmatprep.subr.mxu0 0.0
    %429 = vmatpush1.xpose.msra.mxu0 %v412
    %430 = vmatprep.subr.mxu0 0.0
    %431 = vmatpush1.xpose.msra.mxu0 0.0
    %432 = vmatprep.subr.mxu0 0.0
    %433 = vmatpush1.xpose.msra.mxu0 0.0
    %434 = vmatprep.subr.mxu0 0.0
    %435 = vmatpush1.xpose.msra.mxu0 0.0
    %436 = vmatprep.subr.mxu0 0.0
    %437 = vmatpush1.xpose.msra.mxu0 0.0
    %438 = vmatprep.subr.mxu0 0.0
    %439 = vmatpush1.xpose.msra.mxu0 0.0
    %440 = vmatprep.subr.mxu0 0.0
    %441 = vmatpush1.xpose.msra.mxu0 0.0
    %442 = vmatprep.subr.mxu0 0.0
    %443 = vmatpush1.xpose.msra.mxu0 0.0
    %444 = vmatprep.subr.mxu0 0.0
    %445 = vmatpush1.xpose.msra.mxu0 0.0
    %446 = vmatprep.subr.mxu0 0.0
    %447 = vmatpush1.xpose.msra.mxu0 0.0
    %448 = vmatprep.subr.mxu0 0.0
    %449 = vmatpush1.xpose.msra.mxu0 0.0
    %450 = vmatprep.subr.mxu0 0.0
    %451 = vmatpush1.xpose.msra.mxu0 0.0
    %452 = vmatprep.subr.mxu0 0.0
    %453 = vmatpush1.xpose.msra.mxu0 0.0
    %454 = vmatprep.subr.mxu0 0.0
    %455 = vmatpush1.xpose.msra.mxu0 0.0
    %456 = vmatprep.subr.mxu0 0.0
    %457 = vmatpush1.xpose.msra.mxu0 0.0
    %458 = vmatprep.subr.mxu0 0.0
    %459 = vmatpush1.xpose.msra.mxu0 0.0
    %460 = vmatprep.subr.mxu0 0.0
    %461 = vmatpush1.xpose.msra.mxu0 0.0
    %462 = vmatprep.subr.mxu0 0.0
    %463 = vmatpush1.xpose.msra.mxu0 0.0
    %464 = vmatprep.subr.mxu0 0.0
    %465 = vmatpush1.xpose.msra.mxu0 0.0
    %466 = vmatprep.subr.mxu0 0.0
    %467 = vmatpush1.xpose.msra.mxu0 0.0
    %468 = vmatprep.subr.mxu0 0.0
    %469 = vmatpush1.xpose.msra.mxu0 0.0
    %470 = vmatprep.subr.mxu0 0.0
    %471 = vmatpush1.xpose.msra.mxu0 0.0
    %472 = vmatprep.subr.mxu0 0.0
    %473 = vmatpush1.xpose.msra.mxu0 0.0
    %474 = vmatprep.subr.mxu0 0.0
    %475 = vmatpush1.xpose.msra.mxu0 0.0
    %476 = vmatprep.subr.mxu0 0.0
    %477 = vmatpush1.xpose.msra.mxu0 0.0
    %478 = vmatprep.mubr.f32.mxu0 0.0
    %479 = vmatmul.mubr.f32.gmra.mrb[0].mxu0 %v385
    %v480 = vpop.f32.mrb[0].mxu0
    %v481 = vadd.f32 0.0, %v480
    %v482 = vpop.f32.mrb[0].mxu0
    %483 = vmatprep.mubr.f32.mxu0 0.0
    %484 = vmatmul.mubr.f32.gmra.mrb[0].mxu0 %v388
    %v485 = vpop.f32.mrb[0].mxu0
    %v486 = vadd.f32 0.0, %v485
    %v487 = vpop.f32.mrb[0].mxu0
    %488 = vdwg.mxu0
    %v489 = vlaneseq
    %v490 = vshrl.u32 %v489, 7
    %v491 = vsub.s32 1, %v490
    %v492 = vrot.slane %v23, %v491
    %v493 = vsub.f32 %v492, %v481
    %v494 = vsub.f32 %v492, %v486
    %v495 = vsel %vm144, %v493, inf
    %496 = vmin.xlane.f32.xlu0 %v495
    %v497 = vpop.xlane.xlu0 %496
    %v498 = vsel %vm144, %v494, inf
    %499 = vmin.xlane.f32.xlu0 %v498
    %v500 = vpop.xlane.xlu0 %499
    %vm501 = vcmp.le.f32.partialorder %v493, %v497
    %vm502 = vcmp.le.f32.partialorder %v494, %v500
    %v503 = vsel %vm501, %v152, 64
    %v504 = vsel %vm502, %v152, 64
    %v505 = vsel %vm144, %v503, 2147483647
    %v506 = vand.u32 %v505, 65535
    %v507 = vshra.s32 %v505, 16
    %v508 = vcvt.s32.f32 %v506
    %v509 = vcvt.s32.f32 %v507
    %510 = vmin.xlane.f32.xlu0 %v509
    %v511 = vpop.xlane.xlu0 %510
    %vm512 = vcmp.eq.f32.partialorder %v509, %v511
    %v513 = vsel %vm512, %v508, inf
    %514 = vmin.xlane.f32.xlu0 %v513
    %v515 = vpop.xlane.xlu0 %514
    %v516 = vcvt.f32.s32 %v515
    %v517 = vcvt.f32.s32 %v511
    %v518 = vshll.u32 %v517, 16
    %v519 = vadd.s32 %v518, %v516
    %v520 = vsel %vm144, %v504, 2147483647
    %v521 = vand.u32 %v520, 65535
    %v522 = vshra.s32 %v520, 16
    %v523 = vcvt.s32.f32 %v521
    %v524 = vcvt.s32.f32 %v522
    %525 = vmin.xlane.f32.xlu0 %v524
    %v526 = vpop.xlane.xlu0 %525
    %vm527 = vcmp.eq.f32.partialorder %v524, %v526
    %v528 = vsel %vm527, %v523, inf
    %529 = vmin.xlane.f32.xlu0 %v528
    %v530 = vpop.xlane.xlu0 %529
    %v531 = vcvt.f32.s32 %v530
    %v532 = vcvt.f32.s32 %v526
    %v533 = vshll.u32 %v532, 16
    %v534 = vadd.s32 %v533, %v531
    %vm535 = vcmp.eq.s32.totalorder %v152, %v519
    %vm536 = vcmp.eq.s32.totalorder %v152, %v534
    %v537 = vsel %vm535, 1, 0
    %v538 = vsel %vm536, 1, 0
    %v539 = vcvt.s32.f32 %v537
    %v540 = vcvt.s32.f32 %v538
    %v542 = vsel %vm144, %v539, 0
    %v545 = vsel %vm144, %v540, 0
    %547 = vmatprep.subr.mxu0 0.0
    %548 = vmatpush1.msra.mxu0 %v376
    %549 = vmatprep.subr.mxu0 0.0
    %550 = vmatpush1.msra.mxu0 %v377
    %551 = vmatprep.subr.mxu0 0.0
    %552 = vmatpush1.msra.mxu0 %v378
    %553 = vmatprep.subr.mxu0 0.0
    %554 = vmatpush1.msra.mxu0 %v379
    %555 = vmatprep.subr.mxu0 0.0
    %556 = vmatpush1.msra.mxu0 %v380
    %557 = vmatprep.subr.mxu0 0.0
    %558 = vmatpush1.msra.mxu0 %v381
    %559 = vmatprep.subr.mxu0 0.0
    %560 = vmatpush1.msra.mxu0 %v382
    %561 = vmatprep.subr.mxu0 0.0
    %562 = vmatpush1.msra.mxu0 %v383
    %563 = vmatprep.subr.mxu0 0.0
    %564 = vmatpush1.msra.mxu0 0.0
    %565 = vmatprep.subr.mxu0 0.0
    %566 = vmatpush1.msra.mxu0 0.0
    %567 = vmatprep.subr.mxu0 0.0
    %568 = vmatpush1.msra.mxu0 0.0
    %569 = vmatprep.subr.mxu0 0.0
    %570 = vmatpush1.msra.mxu0 0.0
    %571 = vmatprep.subr.mxu0 0.0
    %572 = vmatpush1.msra.mxu0 0.0
    %573 = vmatprep.subr.mxu0 0.0
    %574 = vmatpush1.msra.mxu0 0.0
    %575 = vmatprep.subr.mxu0 0.0
    %576 = vmatpush1.msra.mxu0 0.0
    %577 = vmatprep.subr.mxu0 0.0
    %578 = vmatpush1.msra.mxu0 0.0
    %579 = vmatprep.subr.mxu0 0.0
    %580 = vmatpush1.msra.mxu0 0.0
    %581 = vmatprep.subr.mxu0 0.0
    %582 = vmatpush1.msra.mxu0 0.0
    %583 = vmatprep.subr.mxu0 0.0
    %584 = vmatpush1.msra.mxu0 0.0
    %585 = vmatprep.subr.mxu0 0.0
    %586 = vmatpush1.msra.mxu0 0.0
    %587 = vmatprep.subr.mxu0 0.0
    %588 = vmatpush1.msra.mxu0 0.0
    %589 = vmatprep.subr.mxu0 0.0
    %590 = vmatpush1.msra.mxu0 0.0
    %591 = vmatprep.subr.mxu0 0.0
    %592 = vmatpush1.msra.mxu0 0.0
    %593 = vmatprep.subr.mxu0 0.0
    %594 = vmatpush1.msra.mxu0 0.0
    %595 = vmatprep.subr.mxu0 0.0
    %596 = vmatpush1.msra.mxu0 0.0
    %597 = vmatprep.subr.mxu0 0.0
    %598 = vmatpush1.msra.mxu0 0.0
    %599 = vmatprep.subr.mxu0 0.0
    %600 = vmatpush1.msra.mxu0 0.0
    %601 = vmatprep.subr.mxu0 0.0
    %602 = vmatpush1.msra.mxu0 0.0
    %603 = vmatprep.subr.mxu0 0.0
    %604 = vmatpush1.msra.mxu0 0.0
    %605 = vmatprep.subr.mxu0 0.0
    %606 = vmatpush1.msra.mxu0 0.0
    %607 = vmatprep.subr.mxu0 0.0
    %608 = vmatpush1.msra.mxu0 0.0
    %609 = vmatprep.subr.mxu0 0.0
    %610 = vmatpush1.msra.mxu0 0.0
    %611 = vmatprep.mubr.f32.mxu0 0.0
    %612 = vmatmul.mubr.f32.gmra.mrb[0].mxu0 %v542
    %v613 = vpop.f32.mrb[0].mxu0
    %v614 = vadd.f32 0.0, %v613
    %v615 = vpop.f32.mrb[0].mxu0
    %616 = vmatprep.mubr.f32.mxu0 0.0
    %617 = vmatmul.mubr.f32.gmra.mrb[0].mxu0 %v545
    %v618 = vpop.f32.mrb[0].mxu0
    %v619 = vadd.f32 0.0, %v618
    %v620 = vpop.f32.mrb[0].mxu0
    %621 = vdwg.mxu0
    %v622 = vsub.f32 %v274, %v614
    %v623 = vsub.f32 %v275, %v619
    %v624 = vmul.f32 %v622, %v622
    %v625 = vmul.f32 %v623, %v623
    %v626 = vsel %vm32, %v624, 0.0
    %627 = vadd.xlane.f32.xlu0 %v626
    %v628 = vpop.xlane.xlu0 %627
    %v629 = vsel %vm32, %v625, 0.0
    %630 = vadd.xlane.f32.xlu0 %v629
    %v631 = vpop.xlane.xlu0 %630
    %v632 = vadd.f32 %v284, %v628
    %v633 = vadd.f32 %v285, %v631
    %v634 = vlaneseq
    %v635 = vshrl.u32 %v634, 7
    %v636 = vsub.s32 %v152, %v635
    %v637 = vrot.slane %v519, %v636
    %v638 = vlaneseq
    %v639 = vshrl.u32 %v638, 7
    %v640 = vsub.s32 %v290, %v639
    %v641 = vrot.slane %v534, %v640
    %v642 = vsel %vm295, %v641, %v637
    %643 = vst.msk [vmem:[#allocation4 + $0x1] sm:$0x1] %vm297, %v642
    %644 = vmatprep.subr.mxu0 0.0
    %645 = vmatpush1.msra.mxu0 %v539
    %646 = vmatprep.subr.mxu0 0.0
    %647 = vmatpush1.msra.mxu0 %v540
    %648 = vmatprep.subr.mxu0 0.0
    %649 = vmatpush1.msra.mxu0 0.0
    %650 = vmatprep.subr.mxu0 0.0
    %651 = vmatpush1.msra.mxu0 0.0
    %652 = vmatprep.subr.mxu0 0.0
    %653 = vmatpush1.msra.mxu0 0.0
    %654 = vmatprep.subr.mxu0 0.0
    %655 = vmatpush1.msra.mxu0 0.0
    %656 = vmatprep.subr.mxu0 0.0
    %657 = vmatpush1.msra.mxu0 0.0
    %658 = vmatprep.subr.mxu0 0.0
    %659 = vmatpush1.msra.mxu0 0.0
    %660 = vmatprep.subr.mxu0 0.0
    %661 = vmatpush1.msra.mxu0 0.0
    %662 = vmatprep.subr.mxu0 0.0
    %663 = vmatpush1.msra.mxu0 0.0
    %664 = vmatprep.subr.mxu0 0.0
    %665 = vmatpush1.msra.mxu0 0.0
    %666 = vmatprep.subr.mxu0 0.0
    %667 = vmatpush1.msra.mxu0 0.0
    %668 = vmatprep.subr.mxu0 0.0
    %669 = vmatpush1.msra.mxu0 0.0
    %670 = vmatprep.subr.mxu0 0.0
    %671 = vmatpush1.msra.mxu0 0.0
    %672 = vmatprep.subr.mxu0 0.0
    %673 = vmatpush1.msra.mxu0 0.0
    %674 = vmatprep.subr.mxu0 0.0
    %675 = vmatpush1.msra.mxu0 0.0
    %676 = vmatprep.subr.mxu0 0.0
    %677 = vmatpush1.msra.mxu0 0.0
    %678 = vmatprep.subr.mxu0 0.0
    %679 = vmatpush1.msra.mxu0 0.0
    %680 = vmatprep.subr.mxu0 0.0
    %681 = vmatpush1.msra.mxu0 0.0
    %682 = vmatprep.subr.mxu0 0.0
    %683 = vmatpush1.msra.mxu0 0.0
    %684 = vmatprep.subr.mxu0 0.0
    %685 = vmatpush1.msra.mxu0 0.0
    %686 = vmatprep.subr.mxu0 0.0
    %687 = vmatpush1.msra.mxu0 0.0
    %688 = vmatprep.subr.mxu0 0.0
    %689 = vmatpush1.msra.mxu0 0.0
    %690 = vmatprep.subr.mxu0 0.0
    %691 = vmatpush1.msra.mxu0 0.0
    %692 = vmatprep.subr.mxu0 0.0
    %693 = vmatpush1.msra.mxu0 0.0
    %694 = vmatprep.subr.mxu0 0.0
    %695 = vmatpush1.msra.mxu0 0.0
    %696 = vmatprep.subr.mxu0 0.0
    %697 = vmatpush1.msra.mxu0 0.0
    %698 = vmatprep.subr.mxu0 0.0
    %699 = vmatpush1.msra.mxu0 0.0
    %700 = vmatprep.subr.mxu0 0.0
    %701 = vmatpush1.msra.mxu0 0.0
    %702 = vmatprep.subr.mxu0 0.0
    %703 = vmatpush1.msra.mxu0 0.0
    %704 = vmatprep.subr.mxu0 0.0
    %705 = vmatpush1.msra.mxu0 0.0
    %706 = vmatprep.subr.mxu0 0.0
    %707 = vmatpush1.msra.mxu0 0.0
    %708 = vmatprep.mubr.f32.mxu0 0.0
    %709 = vmatmul.mubr.f32.gmra.mrb[0].mxu0 %v301
    %v710 = vpop.f32.mrb[0].mxu0
    %v711 = vadd.f32 0.0, %v710
    %v712 = vpop.f32.mrb[0].mxu0
    %713 = vdwg.mxu0
    %714 = vst.msk [vmem:[#allocation7 + $0x1] sm:$0x1] %vm373, %v711
    %v715 = vsub.f32 %v21, %v622
    %v716 = vsub.f32 %v22, %v623
    %717 = vst.msk [vmem:[#allocation2] sm:$0xff] %vm32, %v715
    %718 = vst.msk [vmem:[#allocation2 + $0x8] sm:$0xff] %vm32, %v716
    %719 = vmatprep.subr.mxu0 0.0
    %720 = vmatpush1.msra.mxu0 %v632
    %721 = vmatprep.subr.mxu0 0.0
    %722 = vmatpush1.msra.mxu0 %v633
    %723 = vmatprep.subr.mxu0 0.0
    %724 = vmatpush1.msra.mxu0 0.0
    %725 = vmatprep.subr.mxu0 0.0
    %726 = vmatpush1.msra.mxu0 0.0
    %727 = vmatprep.subr.mxu0 0.0
    %728 = vmatpush1.msra.mxu0 0.0
    %729 = vmatprep.subr.mxu0 0.0
    %730 = vmatpush1.msra.mxu0 0.0
    %731 = vmatprep.subr.mxu0 0.0
    %732 = vmatpush1.msra.mxu0 0.0
    %733 = vmatprep.subr.mxu0 0.0
    %734 = vmatpush1.msra.mxu0 0.0
    %735 = vmatprep.subr.mxu0 0.0
    %736 = vmatpush1.msra.mxu0 0.0
    %737 = vmatprep.subr.mxu0 0.0
    %738 = vmatpush1.msra.mxu0 0.0
    %739 = vmatprep.subr.mxu0 0.0
    %740 = vmatpush1.msra.mxu0 0.0
    %741 = vmatprep.subr.mxu0 0.0
    %742 = vmatpush1.msra.mxu0 0.0
    %743 = vmatprep.subr.mxu0 0.0
    %744 = vmatpush1.msra.mxu0 0.0
    %745 = vmatprep.subr.mxu0 0.0
    %746 = vmatpush1.msra.mxu0 0.0
    %747 = vmatprep.subr.mxu0 0.0
    %748 = vmatpush1.msra.mxu0 0.0
    %749 = vmatprep.subr.mxu0 0.0
    %750 = vmatpush1.msra.mxu0 0.0
    %751 = vmatprep.subr.mxu0 0.0
    %752 = vmatpush1.msra.mxu0 0.0
    %753 = vmatprep.subr.mxu0 0.0
    %754 = vmatpush1.msra.mxu0 0.0
    %755 = vmatprep.subr.mxu0 0.0
    %756 = vmatpush1.msra.mxu0 0.0
    %757 = vmatprep.subr.mxu0 0.0
    %758 = vmatpush1.msra.mxu0 0.0
    %759 = vmatprep.subr.mxu0 0.0
    %760 = vmatpush1.msra.mxu0 0.0
    %761 = vmatprep.subr.mxu0 0.0
    %762 = vmatpush1.msra.mxu0 0.0
    %763 = vmatprep.subr.mxu0 0.0
    %764 = vmatpush1.msra.mxu0 0.0
    %765 = vmatprep.subr.mxu0 0.0
    %766 = vmatpush1.msra.mxu0 0.0
    %767 = vmatprep.subr.mxu0 0.0
    %768 = vmatpush1.msra.mxu0 0.0
    %769 = vmatprep.subr.mxu0 0.0
    %770 = vmatpush1.msra.mxu0 0.0
    %771 = vmatprep.subr.mxu0 0.0
    %772 = vmatpush1.msra.mxu0 0.0
    %773 = vmatprep.subr.mxu0 0.0
    %774 = vmatpush1.msra.mxu0 0.0
    %775 = vmatprep.subr.mxu0 0.0
    %776 = vmatpush1.msra.mxu0 0.0
    %777 = vmatprep.subr.mxu0 0.0
    %778 = vmatpush1.msra.mxu0 0.0
    %779 = vmatprep.subr.mxu0 0.0
    %780 = vmatpush1.msra.mxu0 0.0
    %781 = vmatprep.subr.mxu0 0.0
    %782 = vmatpush1.msra.mxu0 0.0
    %783 = vmatprep.mubr.f32.mxu0 0.0
    %784 = vmatmul.mubr.f32.gmra.mrb[0].mxu0 %v301
    %v785 = vpop.f32.mrb[0].mxu0
    %v786 = vadd.f32 0.0, %v785
    %v787 = vpop.f32.mrb[0].mxu0
    %788 = vdwg.mxu0
    %790 = vset.pattern.permute.xlu0 0
    %791 = vperm.xlu0 %790, %v786
    %v792 = vpop.permute.xlu0 %791
    %794 = vst [vmem:[#allocation6] sm:$0x1] %v792
    // Predicated region
    $region14: #{tpu_custom_call.1} parent=1 // pred_check
      _
    $region15: #{tpu_custom_call.1} parent=1 // pred_check_branch
      %796 = sbr.rel (0) target = $region17
    $region16: #{tpu_custom_call.1} parent=1 // pred_region
      %s798 = ssub.s32 256, 256
      %799 = vsyncadd [#allocation3], %s798
      %s800 = sshll.u32 [#allocation2], 4
      %s801 = int_to_ptr.vmem [resolvable:$true] %s800
      %806 = dma.vmem_to_hbm [thread:$0]  %s801, 256, %s3, [#allocation3], 128, 128, 8
    $region17: #{tpu_custom_call.1} parent=1 // pred_fallthru
      _
    // Predicated region
    $region18: #{tpu_custom_call.1} parent=1 // pred_check
      _
    $region19: #{tpu_custom_call.1} parent=1 // pred_check_branch
      %808 = sbr.rel (0) target = $region21
    $region20: #{tpu_custom_call.1} parent=1 // pred_region
      %s810 = ssub.s32 32, 32
      %811 = vsyncadd [#allocation5], %s810
      %s813 = sshll.u32 [#allocation4], 4
      %s814 = int_to_ptr.vmem [resolvable:$true] %s813
      %816 = dma.vmem_to_hbm [thread:$0]  %s814, 32, %s4, [#allocation5]
    $region21: #{tpu_custom_call.1} parent=1 // pred_fallthru
      _
    // Predicated region
    $region22: #{tpu_custom_call.1} parent=1 // pred_check
      _
    $region23: #{tpu_custom_call.1} parent=1 // pred_check_branch
      %818 = sbr.rel (0) target = $region25
    $region24: #{tpu_custom_call.1} parent=1 // pred_region
      %s820 = ssub.s32 16, 16
      %821 = vsyncadd [#allocation5], %s820
      %s823 = sshll.u32 [#allocation6], 4
      %s824 = int_to_ptr.vmem [resolvable:$true] %s823
      %826 = dma.vmem_to_hbm [thread:$0]  %s824, 16, %s5, [#allocation5]
    $region25: #{tpu_custom_call.1} parent=1 // pred_fallthru
      _
    // Predicated region
    $region26: #{tpu_custom_call.1} parent=1 // pred_check
      _
    $region27: #{tpu_custom_call.1} parent=1 // pred_check_branch
      %828 = sbr.rel (0) target = $region29
    $region28: #{tpu_custom_call.1} parent=1 // pred_region
      %s830 = ssub.s32 32, 32
      %831 = vsyncadd [#allocation8], %s830
      %s833 = sshll.u32 [#allocation7], 4
      %s834 = int_to_ptr.vmem [resolvable:$true] %s833
      %836 = dma.vmem_to_hbm [thread:$0]  %s834, 32, %s6, [#allocation8]
    $region29: #{tpu_custom_call.1} parent=1 // pred_fallthru
      _
    // Predicated region
    $region30: #{tpu_custom_call.1} parent=1 // pred_check
      _
    $region31: #{tpu_custom_call.1} parent=1 // pred_check_branch
      %838 = sbr.rel (0) target = $region33
    $region32: #{tpu_custom_call.1} parent=1 // pred_region
      %839 = dma.done [#allocation3], 256
    $region33: #{tpu_custom_call.1} parent=1 // pred_fallthru
      _
    // Predicated region
    $region34: #{tpu_custom_call.1} parent=1 // pred_check
      _
    $region35: #{tpu_custom_call.1} parent=1 // pred_check_branch
      %841 = sbr.rel (0) target = $region37
    $region36: #{tpu_custom_call.1} parent=1 // pred_region
      %842 = dma.done [#allocation5], 32
    $region37: #{tpu_custom_call.1} parent=1 // pred_fallthru
      _
    // Predicated region
    $region38: #{tpu_custom_call.1} parent=1 // pred_check
      _
    $region39: #{tpu_custom_call.1} parent=1 // pred_check_branch
      %844 = sbr.rel (0) target = $region41
    $region40: #{tpu_custom_call.1} parent=1 // pred_region
      %845 = dma.done [#allocation5], 16
    $region41: #{tpu_custom_call.1} parent=1 // pred_fallthru
      _
    // Predicated region
    $region42: #{tpu_custom_call.1} parent=1 // pred_check
      _
    $region43: #{tpu_custom_call.1} parent=1 // pred_check_branch
      %847 = sbr.rel (0) target = $region45
    $region44: #{tpu_custom_call.1} parent=1 // pred_region
      %848 = dma.done [#allocation8], 32
    $region45: #{tpu_custom_call.1} parent=1 // pred_fallthru
      _
    %849 = vsyncpa [#allocation3], 1
    %850 = vsyncpa [#allocation5], 1
    %851 = vsyncpa [#allocation8], 1

</llo_original>
